<compile_context>
chip_gen: v5e
topology: v5e:2x2
jax: 0.10.0
libtpu: 0.0.40
codegen_flags: <defaults>
</compile_context>

<pallas_src>
import functools

import jax
import jax.numpy as jnp
from jax.experimental import pallas as pl
from jax.experimental.pallas import tpu as pltpu


_LN_EPS = 1e-5


def _gelu(x):
    # TODO(synk): PyTorch nn.GELU() defaults to the exact erf formulation; erf
    # is not guaranteed to lower in Mosaic, so we use the tanh approximation
    # (max abs deviation ~1e-3 on typical activations).
    # Python-float constants keep the computation in x.dtype (bf16 on v6e/v7x).
    return 0.5 * x * (1.0 + jnp.tanh(0.7978845608028654 * (x + 0.044715 * x * x * x)))


def _mask_predictor_kernel(x_ref, gamma_ref, beta_ref, *refs,
                           fuse_w1, compute_dtype):
    """refs = (*weight_refs, out_ref).

    Weight refs (fused w1):   w1 (D,H) bf16, b1l, b1g, w2t, w2b, b2, w3, b3,
                              w4row, b4
    Weight refs (split w1):   w1l, b1l, w1g, b1g, w2t, w2b, b2, w3, b3,
                              w4row, b4
    """
    out_ref = refs[-1]
    if fuse_w1:
        (w1_ref, b1l_ref, b1g_ref, w2t_ref, w2b_ref, b2_ref,
         w3_ref, b3_ref, w4row_ref, b4_ref) = refs[:-1]
    else:
        (w1l_ref, b1l_ref, w1g_ref, b1g_ref, w2t_ref, w2b_ref, b2_ref,
         w3_ref, b3_ref, w4row_ref, b4_ref) = refs[:-1]

    tb, n, d = x_ref.shape
    rows = tb * n
    hh = b1l_ref.shape[-1]
    inv_n = jnp.float32(1.0 / n)
    inv_d = jnp.float32(1.0 / d)
    cd = compute_dtype

    # ---- LayerNorm (stable two-pass variance) -------------------------------
    x = x_ref[...].reshape(rows, d)            # free relayout when N % 8 == 0
    mu = jnp.sum(x, axis=-1, keepdims=True) * inv_d
    xc = x - mu
    var = jnp.sum(xc * xc, axis=-1, keepdims=True) * inv_d
    xn = xc * jax.lax.rsqrt(var + _LN_EPS)
    xn = (xn * gamma_ref[...] + beta_ref[...]).astype(jnp.bfloat16)

    # ---- layer1: Linear (+bias) + GELU, local/global split ------------------
    if fuse_w1:
        # Single (rows, D) @ (D, H) dot; slice at the tile-aligned H/2 boundary.
        z_pre = jnp.dot(xn, w1_ref[...], preferred_element_type=jnp.float32)
        zl_pre = z_pre[:, :hh]
        zg_pre = z_pre[:, hh:]
    else:
        zl_pre = jnp.dot(xn, w1l_ref[...], preferred_element_type=jnp.float32)
        zg_pre = jnp.dot(xn, w1g_ref[...], preferred_element_type=jnp.float32)

    z_local = _gelu((zl_pre + b1l_ref[...]).astype(cd))          # (rows, H/2) cd
    z_global = _gelu(zg_pre + b1g_ref[...])                      # (rows, H/2) f32
    # per-batch mean over the sequence axis (torch .mean(dim=1)), kept in f32
    z_gmean = jnp.sum(z_global.reshape(tb, n, hh), axis=1) * inv_n   # (TB, H/2)

    # ---- layer2[0]: concat([local, global]) @ W2
    #               == z_local @ W2_top + z_gmean @ W2_bot (exact) -------------
    h2_tok = jnp.dot(z_local.astype(jnp.bfloat16), w2t_ref[...],
                     preferred_element_type=jnp.float32)         # (rows, H/2)
    h2_glb = jnp.dot(z_gmean.astype(jnp.bfloat16), w2b_ref[...],
                     preferred_element_type=jnp.float32)         # (TB, H/2)
    glb = h2_glb + b2_ref[...]                                   # fold bias once
    h2 = _gelu((h2_tok.reshape(tb, n, hh) + glb[:, None, :]).astype(cd))
    h2 = h2.reshape(rows, hh)                                    # (rows, H/2) cd

    # ---- layer2[2..3]: Linear -> GELU ---------------------------------------
    h3 = _gelu((jnp.dot(h2.astype(jnp.bfloat16), w3_ref[...],
                        preferred_element_type=jnp.float32)
                + b3_ref[...]).astype(cd))                       # (rows, H/4) cd

    # ---- final Linear(H/4, 1) as row-scale + lane reduce; dense (TB, N) store
    o = jnp.sum(h3.reshape(tb, n, -1) * w4row_ref[...], axis=-1) + b4_ref[...]
    out_ref[...] = o.astype(out_ref.dtype)                       # (TB, N)


# ------------------------------ host helpers --------------------------------


def _device_kind():
    try:
        return jax.devices()[0].device_kind.lower()
    except Exception:
        return ""


def _vmem_capacity_bytes(kind):
    try:
        return int(pltpu.get_tpu_info().vmem_capacity_bytes)
    except Exception:
        # Fallback heuristic: v7x has 64 MiB / core, earlier gens 128 MiB.
        return (64 << 20) if ("v7" in kind or "7x" in kind) else (128 << 20)


def _bf16_elementwise_ok(kind):
    """bf16 VPU/EUP exists on v6e/v7x; not on v5e and older (or non-TPU)."""
    if "tpu" not in kind:
        return False
    return not any(v in kind for v in ("v2", "v3", "v4", "v5"))


def _estimate_vmem_bytes(tb, n, d, h):
    rows = tb * n
    hh, hq = h // 2, h // 4
    f32, bf16 = 4, 2
    io = 2 * (rows * d * f32 + rows * f32)                  # 2x-buffered x / out
    w = ((d * h + 2 * hh * hh + hh * hq) * bf16
         + (2 * d + h + hh + 2 * hq + 1) * f32)             # resident weights
    inter = rows * (2 * d + 3 * h + hh + hq) * f32          # live intermediates
    return io + w + inter + (4 << 20)                       # compiler scratch


def _pick_block_b(B, N, D, H, vmem_budget, prefer_two_steps):
    """Largest batch block whose working set fits the VMEM budget.

    Blocks must be a multiple of 8 (output sublane constraint) or the full
    batch.  On v7x we prefer >=2 (ideally even) grid steps so the 'parallel'
    axis can shard across the 2 TensorCores.
    """
    cands = [c for c in range(8, B + 1, 8) if B % c == 0]
    if B not in cands:
        cands.append(B)
    cands.sort()
    fits = [c for c in cands if _estimate_vmem_bytes(c, N, D, H) <= vmem_budget]
    if not fits:
        return cands[0]
    if prefer_two_steps:
        even = [c for c in fits if (B // c) >= 2 and (B // c) % 2 == 0]
        if even:
            return max(even)
        multi = [c for c in fits if (B // c) >= 2]
        if multi:
            return max(multi)
    return max(fits)


def mask_predictor(x, params, *, block_b=None, interpret=False):
    """x: (B, N, D) float32.  Returns (B, N, 1) float32 (matches PyTorch)."""
    B, N, D = x.shape
    (gamma, beta, w1, b1, w2, b2, w3, b3, w4, b4) = params
    H = w1.shape[1]
    assert H % 4 == 0
    Hh, Hq = H // 2, H // 4

    kind = _device_kind()
    vmem_cap = _vmem_capacity_bytes(kind)
    vmem_budget = int(0.75 * vmem_cap)             # ~48 MiB v7x, ~96 MiB v5e/v6e
    prefer_two_steps = ("v7" in kind) or ("7x" in kind)
    compute_dtype = jnp.bfloat16 if _bf16_elementwise_ok(kind) else jnp.float32
    fuse_w1 = (Hh % 128 == 0)                      # tile-aligned result slice

    if block_b is None:
        block_b = _pick_block_b(B, N, D, H, vmem_budget, prefer_two_steps)
    assert B % block_b == 0 and (block_b % 8 == 0 or block_b == B), block_b

    # Host-side weight prep: bf16 matmul weights (MXU-native on every gen;
    # v7x MXU is bf16/fp8-only so no int path to chase), w2 split top/bottom,
    # w4 laid out as a lane row for the elementwise final projection.
    b1l, b1g = b1[:, :Hh], b1[:, Hh:]
    w2t = w2[:Hh, :].astype(jnp.bfloat16)
    w2b = w2[Hh:, :].astype(jnp.bfloat16)
    w3b = w3.astype(jnp.bfloat16)
    w4row = w4.reshape(1, Hq)
    if fuse_w1:
        weights = (gamma, beta, w1.astype(jnp.bfloat16), b1l, b1g,
                   w2t, w2b, b2, w3b, b3, w4row, b4)
    else:
        weights = (gamma, beta,
                   w1[:, :Hh].astype(jnp.bfloat16), b1l,
                   w1[:, Hh:].astype(jnp.bfloat16), b1g,
                   w2t, w2b, b2, w3b, b3, w4row, b4)

    kernel = functools.partial(_mask_predictor_kernel,
                               fuse_w1=fuse_w1, compute_dtype=compute_dtype)

    w_bytes = sum(int(w.size) * w.dtype.itemsize for w in weights)
    cost = pl.CostEstimate(
        flops=int(2 * B * N * (D * H + Hh * Hh + Hh * Hq + Hq) + 2 * B * Hh * Hh),
        transcendentals=int(B * N * (H + Hh + Hq)),
        bytes_accessed=int(B * N * D * 4 + B * N * 4 + w_bytes),
    )
    vmem_limit = int(min(max(_estimate_vmem_bytes(block_b, N, D, H), 8 << 20),
                         vmem_budget))

    def build(single_buffer_weights):
        full2d = lambda b: (0, 0)
        if single_buffer_weights:
            # Grid-invariant blocks: single-buffer to stop wasting ~1x the
            # full bf16 weight footprint on a second pipeline buffer.
            w_specs = [pl.BlockSpec(w.shape, full2d, pipeline_mode=pl.Buffered(1))
                       for w in weights]
        else:
            w_specs = [pl.BlockSpec(w.shape, full2d) for w in weights]
        grid_spec = pltpu.PrefetchScalarGridSpec(
            num_scalar_prefetch=0,
            grid=(B // block_b,),
            in_specs=[pl.BlockSpec((block_b, N, D), lambda b: (b, 0, 0))] + w_specs,
            out_specs=pl.BlockSpec((block_b, N), lambda b: (b, 0)),
        )
        return pl.pallas_call(
            kernel,
            out_shape=jax.ShapeDtypeStruct((B, N), jnp.float32),
            grid_spec=grid_spec,
            compiler_params=pltpu.CompilerParams(
                dimension_semantics=("parallel",),
                vmem_limit_bytes=vmem_limit,
            ),
            cost_estimate=cost,
            interpret=interpret,
        )

    try:
        out2d = build(True)(x, *weights)
    except Exception:
        # TODO(synk): drop this fallback once pl.Buffered(1) single-buffering
        # is confirmed available on the deployed jax version.
        out2d = build(False)(x, *weights)

    return out2d[..., None]  # (B, N, 1) -- free layout plumbing in the wrapper


# ------------------------------- test harness -------------------------------


def init_params(key, in_dim, h_dim):
    """PyTorch-like init: LayerNorm ones/zeros, Linear U(-1/sqrt(fan_in), ...)."""
    def linear(k, fan_in, fan_out):
        kw, kb = jax.random.split(k)
        bound = 1.0 / jnp.sqrt(jnp.float32(fan_in))
        w = jax.random.uniform(kw, (fan_in, fan_out), jnp.float32, -bound, bound)
        b = jax.random.uniform(kb, (1, fan_out), jnp.float32, -bound, bound)
        return w, b

    k1, k2, k3, k4 = jax.random.split(key, 4)
    gamma = jnp.ones((1, in_dim), jnp.float32)
    beta = jnp.zeros((1, in_dim), jnp.float32)
    w1, b1 = linear(k1, in_dim, h_dim)
    w2, b2 = linear(k2, h_dim, h_dim // 2)
    w3, b3 = linear(k3, h_dim // 2, h_dim // 4)
    w4, b4 = linear(k4, h_dim // 4, 1)
    return (gamma, beta, w1, b1, w2, b2, w3, b3, w4, b4)


def _reference(x, params):
    """Pure-JAX f32 forward mirroring the PyTorch module (tanh-GELU)."""
    (gamma, beta, w1, b1, w2, b2, w3, b3, w4, b4) = params
    mu = jnp.mean(x, axis=-1, keepdims=True)
    var = jnp.mean((x - mu) ** 2, axis=-1, keepdims=True)
    xn = (x - mu) * jax.lax.rsqrt(var + _LN_EPS) * gamma[0] + beta[0]
    z = _gelu(xn @ w1 + b1[0])
    h = w1.shape[1]
    z_local, z_global = z[..., : h // 2], z[..., h // 2:]
    z_global = jnp.broadcast_to(
        jnp.mean(z_global, axis=1, keepdims=True), z_local.shape)
    zc = jnp.concatenate([z_local, z_global], axis=-1)
    h2 = _gelu(zc @ w2 + b2[0])
    h3 = _gelu(h2 @ w3 + b3[0])
    return h3 @ w4 + b4[0]


if __name__ == "__main__":
    B, N, IN_DIM, H_DIM = 2, 8, 32, 32  # real deployments: pad dims to x128 host-side

    key = jax.random.PRNGKey(0)
    kx, kp = jax.random.split(key)
    x = jax.random.normal(kx, (B, N, IN_DIM), jnp.float32)
    params = init_params(kp, IN_DIM, H_DIM)

    out = mask_predictor(x, params)
    jax.block_until_ready(out)
    assert out.shape == (B, N, 1), out.shape

    ref = _reference(x, params)
    err = float(jnp.max(jnp.abs(out - ref)))
    # bf16 matmuls (+ bf16 GELU chains on v6e/v7x) with f32 accumulation
    assert err < 5e-2, f"max abs err {err}"

    print("KERNEL_OK")
</pallas_src>

<mosaic_0001>
module attributes {stable_mosaic.version = 11 : i64} {
  func.func @_mask_predictor_kernel(%arg0: i32, %arg1: memref<2x8x32xf32, #tpu.memory_space<vmem>>, %arg2: memref<1x32xf32, #tpu.memory_space<vmem>>, %arg3: memref<1x32xf32, #tpu.memory_space<vmem>>, %arg4: memref<32x16xbf16, #tpu.memory_space<vmem>>, %arg5: memref<1x16xf32, #tpu.memory_space<vmem>>, %arg6: memref<32x16xbf16, #tpu.memory_space<vmem>>, %arg7: memref<1x16xf32, #tpu.memory_space<vmem>>, %arg8: memref<16x16xbf16, #tpu.memory_space<vmem>>, %arg9: memref<16x16xbf16, #tpu.memory_space<vmem>>, %arg10: memref<1x16xf32, #tpu.memory_space<vmem>>, %arg11: memref<16x8xbf16, #tpu.memory_space<vmem>>, %arg12: memref<1x8xf32, #tpu.memory_space<vmem>>, %arg13: memref<1x8xf32, #tpu.memory_space<vmem>>, %arg14: memref<1x1xf32, #tpu.memory_space<vmem>>, %arg15: memref<2x8xf32, #tpu.memory_space<vmem>>) attributes {dimension_semantics = [#tpu.dimension_semantics<parallel>], iteration_bounds = array<i64: 1>, scalar_prefetch = 0 : i64, scratch_operands = 0 : i64, tpu.core_type = #tpu.core_type<tc>, window_params = [{transform_indices = @transform_0, window_bounds = array<i64: 2, 8, 32>}, {pipeline_mode = #tpu.pipeline_mode<synchronous>, transform_indices = @transform_1, window_bounds = array<i64: 1, 32>}, {pipeline_mode = #tpu.pipeline_mode<synchronous>, transform_indices = @transform_2, window_bounds = array<i64: 1, 32>}, {pipeline_mode = #tpu.pipeline_mode<synchronous>, transform_indices = @transform_3, window_bounds = array<i64: 32, 16>}, {pipeline_mode = #tpu.pipeline_mode<synchronous>, transform_indices = @transform_4, window_bounds = array<i64: 1, 16>}, {pipeline_mode = #tpu.pipeline_mode<synchronous>, transform_indices = @transform_5, window_bounds = array<i64: 32, 16>}, {pipeline_mode = #tpu.pipeline_mode<synchronous>, transform_indices = @transform_6, window_bounds = array<i64: 1, 16>}, {pipeline_mode = #tpu.pipeline_mode<synchronous>, transform_indices = @transform_7, window_bounds = array<i64: 16, 16>}, {pipeline_mode = #tpu.pipeline_mode<synchronous>, transform_indices = @transform_8, window_bounds = array<i64: 16, 16>}, {pipeline_mode = #tpu.pipeline_mode<synchronous>, transform_indices = @transform_9, window_bounds = array<i64: 1, 16>}, {pipeline_mode = #tpu.pipeline_mode<synchronous>, transform_indices = @transform_10, window_bounds = array<i64: 16, 8>}, {pipeline_mode = #tpu.pipeline_mode<synchronous>, transform_indices = @transform_11, window_bounds = array<i64: 1, 8>}, {pipeline_mode = #tpu.pipeline_mode<synchronous>, transform_indices = @transform_12, window_bounds = array<i64: 1, 8>}, {pipeline_mode = #tpu.pipeline_mode<synchronous>, transform_indices = @transform_13, window_bounds = array<i64: 1, 1>}, {transform_indices = @transform_14, window_bounds = array<i64: 2, 8>}]} {
    %c0 = arith.constant 0 : index
    %c0_0 = arith.constant 0 : index
    %c0_1 = arith.constant 0 : index
    %0 = vector.load %arg1[%c0, %c0_0, %c0_1] : memref<2x8x32xf32, #tpu.memory_space<vmem>>, vector<2x8x32xf32>
    %1 = vector.shape_cast %0 : vector<2x8x32xf32> to vector<16x32xf32>
    %cst = arith.constant dense<0.000000e+00> : vector<16xf32>
    %2 = vector.multi_reduction <add>, %1, %cst [1] : vector<16x32xf32> to vector<16xf32>
    %3 = vector.shape_cast %2 : vector<16xf32> to vector<16x1xf32>
    %cst_2 = arith.constant 3.125000e-02 : f32
    %4 = vector.broadcast %cst_2 : f32 to vector<16x1xf32>
    %5 = arith.mulf %3, %4 : vector<16x1xf32>
    %6 = vector.broadcast %5 : vector<16x1xf32> to vector<16x32xf32>
    %7 = arith.subf %1, %6 : vector<16x32xf32>
    %8 = arith.mulf %7, %7 : vector<16x32xf32>
    %cst_3 = arith.constant dense<0.000000e+00> : vector<16xf32>
    %9 = vector.multi_reduction <add>, %8, %cst_3 [1] : vector<16x32xf32> to vector<16xf32>
    %10 = vector.shape_cast %9 : vector<16xf32> to vector<16x1xf32>
    %cst_4 = arith.constant 3.125000e-02 : f32
    %11 = vector.broadcast %cst_4 : f32 to vector<16x1xf32>
    %12 = arith.mulf %10, %11 : vector<16x1xf32>
    %cst_5 = arith.constant 9.99999974E-6 : f32
    %13 = vector.broadcast %cst_5 : f32 to vector<16x1xf32>
    %14 = arith.addf %12, %13 : vector<16x1xf32>
    %15 = math.rsqrt %14 : vector<16x1xf32>
    %16 = vector.broadcast %15 : vector<16x1xf32> to vector<16x32xf32>
    %17 = arith.mulf %7, %16 : vector<16x32xf32>
    %c0_6 = arith.constant 0 : index
    %c0_7 = arith.constant 0 : index
    %18 = vector.load %arg2[%c0_6, %c0_7] : memref<1x32xf32, #tpu.memory_space<vmem>>, vector<1x32xf32>
    %19 = vector.broadcast %18 : vector<1x32xf32> to vector<16x32xf32>
    %20 = arith.mulf %17, %19 : vector<16x32xf32>
    %c0_8 = arith.constant 0 : index
    %c0_9 = arith.constant 0 : index
    %21 = vector.load %arg3[%c0_8, %c0_9] : memref<1x32xf32, #tpu.memory_space<vmem>>, vector<1x32xf32>
    %22 = vector.broadcast %21 : vector<1x32xf32> to vector<16x32xf32>
    %23 = arith.addf %20, %22 : vector<16x32xf32>
    %24 = arith.truncf %23 : vector<16x32xf32> to vector<16x32xbf16>
    %c0_10 = arith.constant 0 : index
    %c0_11 = arith.constant 0 : index
    %25 = vector.load %arg4[%c0_10, %c0_11] : memref<32x16xbf16, #tpu.memory_space<vmem>>, vector<32x16xbf16>
    %cst_12 = arith.constant dense<0.000000e+00> : vector<16x16xf32>
    %26 = tpu.matmul %24, %25, %cst_12 {dimension_numbers = #tpu.dot_dimension_numbers<[1], [0], [0], [1], [0, 0, 1, 1], [], []>} : vector<16x32xbf16>, vector<32x16xbf16>, vector<16x16xf32> -> vector<16x16xf32>
    %c0_13 = arith.constant 0 : index
    %c0_14 = arith.constant 0 : index
    %27 = vector.load %arg6[%c0_13, %c0_14] : memref<32x16xbf16, #tpu.memory_space<vmem>>, vector<32x16xbf16>
    %cst_15 = arith.constant dense<0.000000e+00> : vector<16x16xf32>
    %28 = tpu.matmul %24, %27, %cst_15 {dimension_numbers = #tpu.dot_dimension_numbers<[1], [0], [0], [1], [0, 0, 1, 1], [], []>} : vector<16x32xbf16>, vector<32x16xbf16>, vector<16x16xf32> -> vector<16x16xf32>
    %c0_16 = arith.constant 0 : index
    %c0_17 = arith.constant 0 : index
    %29 = vector.load %arg5[%c0_16, %c0_17] : memref<1x16xf32, #tpu.memory_space<vmem>>, vector<1x16xf32>
    %30 = vector.broadcast %29 : vector<1x16xf32> to vector<16x16xf32>
    %31 = arith.addf %26, %30 : vector<16x16xf32>
    %cst_18 = arith.constant 5.000000e-01 : f32
    %32 = vector.broadcast %cst_18 : f32 to vector<16x16xf32>
    %33 = arith.mulf %32, %31 : vector<16x16xf32>
    %cst_19 = arith.constant 4.471500e-02 : f32
    %34 = vector.broadcast %cst_19 : f32 to vector<16x16xf32>
    %35 = arith.mulf %34, %31 : vector<16x16xf32>
    %36 = arith.mulf %35, %31 : vector<16x16xf32>
    %37 = arith.mulf %36, %31 : vector<16x16xf32>
    %38 = arith.addf %31, %37 : vector<16x16xf32>
    %cst_20 = arith.constant 0.797884583 : f32
    %39 = vector.broadcast %cst_20 : f32 to vector<16x16xf32>
    %40 = arith.mulf %39, %38 : vector<16x16xf32>
    %41 = math.tanh %40 : vector<16x16xf32>
    %cst_21 = arith.constant 1.000000e+00 : f32
    %42 = vector.broadcast %cst_21 : f32 to vector<16x16xf32>
    %43 = arith.addf %42, %41 : vector<16x16xf32>
    %44 = arith.mulf %33, %43 : vector<16x16xf32>
    %c0_22 = arith.constant 0 : index
    %c0_23 = arith.constant 0 : index
    %45 = vector.load %arg7[%c0_22, %c0_23] : memref<1x16xf32, #tpu.memory_space<vmem>>, vector<1x16xf32>
    %46 = vector.broadcast %45 : vector<1x16xf32> to vector<16x16xf32>
    %47 = arith.addf %28, %46 : vector<16x16xf32>
    %cst_24 = arith.constant 5.000000e-01 : f32
    %48 = vector.broadcast %cst_24 : f32 to vector<16x16xf32>
    %49 = arith.mulf %48, %47 : vector<16x16xf32>
    %cst_25 = arith.constant 4.471500e-02 : f32
    %50 = vector.broadcast %cst_25 : f32 to vector<16x16xf32>
    %51 = arith.mulf %50, %47 : vector<16x16xf32>
    %52 = arith.mulf %51, %47 : vector<16x16xf32>
    %53 = arith.mulf %52, %47 : vector<16x16xf32>
    %54 = arith.addf %47, %53 : vector<16x16xf32>
    %cst_26 = arith.constant 0.797884583 : f32
    %55 = vector.broadcast %cst_26 : f32 to vector<16x16xf32>
    %56 = arith.mulf %55, %54 : vector<16x16xf32>
    %57 = math.tanh %56 : vector<16x16xf32>
    %cst_27 = arith.constant 1.000000e+00 : f32
    %58 = vector.broadcast %cst_27 : f32 to vector<16x16xf32>
    %59 = arith.addf %58, %57 : vector<16x16xf32>
    %60 = arith.mulf %49, %59 : vector<16x16xf32>
    %61 = vector.shape_cast %60 : vector<16x16xf32> to vector<2x8x16xf32>
    %cst_28 = arith.constant dense<0.000000e+00> : vector<2x16xf32>
    %62 = vector.multi_reduction <add>, %61, %cst_28 [1] : vector<2x8x16xf32> to vector<2x16xf32>
    %cst_29 = arith.constant 1.250000e-01 : f32
    %63 = vector.broadcast %cst_29 : f32 to vector<2x16xf32>
    %64 = arith.mulf %62, %63 : vector<2x16xf32>
    %65 = arith.truncf %44 : vector<16x16xf32> to vector<16x16xbf16>
    %c0_30 = arith.constant 0 : index
    %c0_31 = arith.constant 0 : index
    %66 = vector.load %arg8[%c0_30, %c0_31] : memref<16x16xbf16, #tpu.memory_space<vmem>>, vector<16x16xbf16>
    %cst_32 = arith.constant dense<0.000000e+00> : vector<16x16xf32>
    %67 = tpu.matmul %65, %66, %cst_32 {dimension_numbers = #tpu.dot_dimension_numbers<[1], [0], [0], [1], [0, 0, 1, 1], [], []>} : vector<16x16xbf16>, vector<16x16xbf16>, vector<16x16xf32> -> vector<16x16xf32>
    %68 = arith.truncf %64 : vector<2x16xf32> to vector<2x16xbf16>
    %c0_33 = arith.constant 0 : index
    %c0_34 = arith.constant 0 : index
    %69 = vector.load %arg9[%c0_33, %c0_34] : memref<16x16xbf16, #tpu.memory_space<vmem>>, vector<16x16xbf16>
    %cst_35 = arith.constant dense<0.000000e+00> : vector<2x16xf32>
    %70 = tpu.matmul %68, %69, %cst_35 {dimension_numbers = #tpu.dot_dimension_numbers<[1], [0], [0], [1], [0, 0, 1, 1], [], []>} : vector<2x16xbf16>, vector<16x16xbf16>, vector<2x16xf32> -> vector<2x16xf32>
    %c0_36 = arith.constant 0 : index
    %c0_37 = arith.constant 0 : index
    %71 = vector.load %arg10[%c0_36, %c0_37] : memref<1x16xf32, #tpu.memory_space<vmem>>, vector<1x16xf32>
    %72 = vector.broadcast %71 : vector<1x16xf32> to vector<2x16xf32>
    %73 = arith.addf %70, %72 : vector<2x16xf32>
    %74 = vector.shape_cast %67 : vector<16x16xf32> to vector<2x8x16xf32>
    %75 = vector.shape_cast %73 : vector<2x16xf32> to vector<2x1x16xf32>
    %76 = vector.broadcast %75 : vector<2x1x16xf32> to vector<2x8x16xf32>
    %77 = arith.addf %74, %76 : vector<2x8x16xf32>
    %cst_38 = arith.constant 5.000000e-01 : f32
    %78 = vector.broadcast %cst_38 : f32 to vector<2x8x16xf32>
    %79 = arith.mulf %78, %77 : vector<2x8x16xf32>
    %cst_39 = arith.constant 4.471500e-02 : f32
    %80 = vector.broadcast %cst_39 : f32 to vector<2x8x16xf32>
    %81 = arith.mulf %80, %77 : vector<2x8x16xf32>
    %82 = arith.mulf %81, %77 : vector<2x8x16xf32>
    %83 = arith.mulf %82, %77 : vector<2x8x16xf32>
    %84 = arith.addf %77, %83 : vector<2x8x16xf32>
    %cst_40 = arith.constant 0.797884583 : f32
    %85 = vector.broadcast %cst_40 : f32 to vector<2x8x16xf32>
    %86 = arith.mulf %85, %84 : vector<2x8x16xf32>
    %87 = math.tanh %86 : vector<2x8x16xf32>
    %cst_41 = arith.constant 1.000000e+00 : f32
    %88 = vector.broadcast %cst_41 : f32 to vector<2x8x16xf32>
    %89 = arith.addf %88, %87 : vector<2x8x16xf32>
    %90 = arith.mulf %79, %89 : vector<2x8x16xf32>
    %91 = vector.shape_cast %90 : vector<2x8x16xf32> to vector<16x16xf32>
    %92 = arith.truncf %91 : vector<16x16xf32> to vector<16x16xbf16>
    %c0_42 = arith.constant 0 : index
    %c0_43 = arith.constant 0 : index
    %93 = vector.load %arg11[%c0_42, %c0_43] : memref<16x8xbf16, #tpu.memory_space<vmem>>, vector<16x8xbf16>
    %cst_44 = arith.constant dense<0.000000e+00> : vector<16x8xf32>
    %94 = tpu.matmul %92, %93, %cst_44 {dimension_numbers = #tpu.dot_dimension_numbers<[1], [0], [0], [1], [0, 0, 1, 1], [], []>} : vector<16x16xbf16>, vector<16x8xbf16>, vector<16x8xf32> -> vector<16x8xf32>
    %c0_45 = arith.constant 0 : index
    %c0_46 = arith.constant 0 : index
    %95 = vector.load %arg12[%c0_45, %c0_46] : memref<1x8xf32, #tpu.memory_space<vmem>>, vector<1x8xf32>
    %96 = vector.broadcast %95 : vector<1x8xf32> to vector<16x8xf32>
    %97 = arith.addf %94, %96 : vector<16x8xf32>
    %cst_47 = arith.constant 5.000000e-01 : f32
    %98 = vector.broadcast %cst_47 : f32 to vector<16x8xf32>
    %99 = arith.mulf %98, %97 : vector<16x8xf32>
    %cst_48 = arith.constant 4.471500e-02 : f32
    %100 = vector.broadcast %cst_48 : f32 to vector<16x8xf32>
    %101 = arith.mulf %100, %97 : vector<16x8xf32>
    %102 = arith.mulf %101, %97 : vector<16x8xf32>
    %103 = arith.mulf %102, %97 : vector<16x8xf32>
    %104 = arith.addf %97, %103 : vector<16x8xf32>
    %cst_49 = arith.constant 0.797884583 : f32
    %105 = vector.broadcast %cst_49 : f32 to vector<16x8xf32>
    %106 = arith.mulf %105, %104 : vector<16x8xf32>
    %107 = math.tanh %106 : vector<16x8xf32>
    %cst_50 = arith.constant 1.000000e+00 : f32
    %108 = vector.broadcast %cst_50 : f32 to vector<16x8xf32>
    %109 = arith.addf %108, %107 : vector<16x8xf32>
    %110 = arith.mulf %99, %109 : vector<16x8xf32>
    %111 = vector.shape_cast %110 : vector<16x8xf32> to vector<2x8x8xf32>
    %c0_51 = arith.constant 0 : index
    %c0_52 = arith.constant 0 : index
    %112 = vector.load %arg13[%c0_51, %c0_52] : memref<1x8xf32, #tpu.memory_space<vmem>>, vector<1x8xf32>
    %113 = vector.shape_cast %112 : vector<1x8xf32> to vector<1x1x8xf32>
    %114 = vector.broadcast %113 : vector<1x1x8xf32> to vector<2x8x8xf32>
    %115 = arith.mulf %111, %114 : vector<2x8x8xf32>
    %cst_53 = arith.constant dense<0.000000e+00> : vector<2x8xf32>
    %116 = vector.multi_reduction <add>, %115, %cst_53 [2] : vector<2x8x8xf32> to vector<2x8xf32>
    %c0_54 = arith.constant 0 : index
    %c0_55 = arith.constant 0 : index
    %117 = vector.load %arg14[%c0_54, %c0_55] : memref<1x1xf32, #tpu.memory_space<vmem>>, vector<1x1xf32>
    %118 = vector.broadcast %117 : vector<1x1xf32> to vector<2x8xf32>
    %119 = arith.addf %116, %118 : vector<2x8xf32>
    %c0_56 = arith.constant 0 : index
    %c0_57 = arith.constant 0 : index
    %120 = vector.load %arg15[%c0_56, %c0_57] : memref<2x8xf32, #tpu.memory_space<vmem>>, vector<2x8xf32>
    tpu.vector_store %arg15[%c0_56, %c0_57], %119 {strides = array<i32>} : memref<2x8xf32, #tpu.memory_space<vmem>>, vector<2x8xf32>,
    return
  }
  func.func @transform_0(%arg0: i32) -> (i32, i32, i32) {
    %c0_i32 = arith.constant 0 : i32
    %c0_i32_0 = arith.constant 0 : i32
    %c0_i32_1 = arith.constant 0 : i32
    return %arg0, %c0_i32, %c0_i32_0 : i32, i32, i32
  }
  func.func @transform_1(%arg0: i32) -> (i32, i32) {
    %c0_i32 = arith.constant 0 : i32
    %c0_i32_0 = arith.constant 0 : i32
    %c0_i32_1 = arith.constant 0 : i32
    return %c0_i32, %c0_i32_0 : i32, i32
  }
  func.func @transform_2(%arg0: i32) -> (i32, i32) {
    %c0_i32 = arith.constant 0 : i32
    %c0_i32_0 = arith.constant 0 : i32
    %c0_i32_1 = arith.constant 0 : i32
    return %c0_i32, %c0_i32_0 : i32, i32
  }
  func.func @transform_3(%arg0: i32) -> (i32, i32) {
    %c0_i32 = arith.constant 0 : i32
    %c0_i32_0 = arith.constant 0 : i32
    %c0_i32_1 = arith.constant 0 : i32
    return %c0_i32, %c0_i32_0 : i32, i32
  }
  func.func @transform_4(%arg0: i32) -> (i32, i32) {
    %c0_i32 = arith.constant 0 : i32
    %c0_i32_0 = arith.constant 0 : i32
    %c0_i32_1 = arith.constant 0 : i32
    return %c0_i32, %c0_i32_0 : i32, i32
  }
  func.func @transform_5(%arg0: i32) -> (i32, i32) {
    %c0_i32 = arith.constant 0 : i32
    %c0_i32_0 = arith.constant 0 : i32
    %c0_i32_1 = arith.constant 0 : i32
    return %c0_i32, %c0_i32_0 : i32, i32
  }
  func.func @transform_6(%arg0: i32) -> (i32, i32) {
    %c0_i32 = arith.constant 0 : i32
    %c0_i32_0 = arith.constant 0 : i32
    %c0_i32_1 = arith.constant 0 : i32
    return %c0_i32, %c0_i32_0 : i32, i32
  }
  func.func @transform_7(%arg0: i32) -> (i32, i32) {
    %c0_i32 = arith.constant 0 : i32
    %c0_i32_0 = arith.constant 0 : i32
    %c0_i32_1 = arith.constant 0 : i32
    return %c0_i32, %c0_i32_0 : i32, i32
  }
  func.func @transform_8(%arg0: i32) -> (i32, i32) {
    %c0_i32 = arith.constant 0 : i32
    %c0_i32_0 = arith.constant 0 : i32
    %c0_i32_1 = arith.constant 0 : i32
    return %c0_i32, %c0_i32_0 : i32, i32
  }
  func.func @transform_9(%arg0: i32) -> (i32, i32) {
    %c0_i32 = arith.constant 0 : i32
    %c0_i32_0 = arith.constant 0 : i32
    %c0_i32_1 = arith.constant 0 : i32
    return %c0_i32, %c0_i32_0 : i32, i32
  }
  func.func @transform_10(%arg0: i32) -> (i32, i32) {
    %c0_i32 = arith.constant 0 : i32
    %c0_i32_0 = arith.constant 0 : i32
    %c0_i32_1 = arith.constant 0 : i32
    return %c0_i32, %c0_i32_0 : i32, i32
  }
  func.func @transform_11(%arg0: i32) -> (i32, i32) {
    %c0_i32 = arith.constant 0 : i32
    %c0_i32_0 = arith.constant 0 : i32
    %c0_i32_1 = arith.constant 0 : i32
    return %c0_i32, %c0_i32_0 : i32, i32
  }
  func.func @transform_12(%arg0: i32) -> (i32, i32) {
    %c0_i32 = arith.constant 0 : i32
    %c0_i32_0 = arith.constant 0 : i32
    %c0_i32_1 = arith.constant 0 : i32
    return %c0_i32, %c0_i32_0 : i32, i32
  }
  func.func @transform_13(%arg0: i32) -> (i32, i32) {
    %c0_i32 = arith.constant 0 : i32
    %c0_i32_0 = arith.constant 0 : i32
    %c0_i32_1 = arith.constant 0 : i32
    return %c0_i32, %c0_i32_0 : i32, i32
  }
  func.func @transform_14(%arg0: i32) -> (i32, i32) {
    %c0_i32 = arith.constant 0 : i32
    %c0_i32_0 = arith.constant 0 : i32
    return %arg0, %c0_i32 : i32, i32
  }
}

module attributes {stable_mosaic.version = 11 : i64} {
  func.func @_mask_predictor_kernel(%arg0: i32, %arg1: memref<2x8x32xf32, #tpu.memory_space<vmem>>, %arg2: memref<1x32xf32, #tpu.memory_space<vmem>>, %arg3: memref<1x32xf32, #tpu.memory_space<vmem>>, %arg4: memref<32x16xbf16, #tpu.memory_space<vmem>>, %arg5: memref<1x16xf32, #tpu.memory_space<vmem>>, %arg6: memref<32x16xbf16, #tpu.memory_space<vmem>>, %arg7: memref<1x16xf32, #tpu.memory_space<vmem>>, %arg8: memref<16x16xbf16, #tpu.memory_space<vmem>>, %arg9: memref<16x16xbf16, #tpu.memory_space<vmem>>, %arg10: memref<1x16xf32, #tpu.memory_space<vmem>>, %arg11: memref<16x8xbf16, #tpu.memory_space<vmem>>, %arg12: memref<1x8xf32, #tpu.memory_space<vmem>>, %arg13: memref<1x8xf32, #tpu.memory_space<vmem>>, %arg14: memref<1x1xf32, #tpu.memory_space<vmem>>, %arg15: memref<2x8xf32, #tpu.memory_space<vmem>>) attributes {dimension_semantics = [#tpu.dimension_semantics<parallel>], iteration_bounds = array<i64: 1>, scalar_prefetch = 0 : i64, scratch_operands = 0 : i64, tpu.core_type = #tpu.core_type<tc>, window_params = [{transform_indices = @transform_0, window_bounds = array<i64: 2, 8, 32>}, {pipeline_mode = #tpu.pipeline_mode<synchronous>, transform_indices = @transform_1, window_bounds = array<i64: 1, 32>}, {pipeline_mode = #tpu.pipeline_mode<synchronous>, transform_indices = @transform_2, window_bounds = array<i64: 1, 32>}, {pipeline_mode = #tpu.pipeline_mode<synchronous>, transform_indices = @transform_3, window_bounds = array<i64: 32, 16>}, {pipeline_mode = #tpu.pipeline_mode<synchronous>, transform_indices = @transform_4, window_bounds = array<i64: 1, 16>}, {pipeline_mode = #tpu.pipeline_mode<synchronous>, transform_indices = @transform_5, window_bounds = array<i64: 32, 16>}, {pipeline_mode = #tpu.pipeline_mode<synchronous>, transform_indices = @transform_6, window_bounds = array<i64: 1, 16>}, {pipeline_mode = #tpu.pipeline_mode<synchronous>, transform_indices = @transform_7, window_bounds = array<i64: 16, 16>}, {pipeline_mode = #tpu.pipeline_mode<synchronous>, transform_indices = @transform_8, window_bounds = array<i64: 16, 16>}, {pipeline_mode = #tpu.pipeline_mode<synchronous>, transform_indices = @transform_9, window_bounds = array<i64: 1, 16>}, {pipeline_mode = #tpu.pipeline_mode<synchronous>, transform_indices = @transform_10, window_bounds = array<i64: 16, 8>}, {pipeline_mode = #tpu.pipeline_mode<synchronous>, transform_indices = @transform_11, window_bounds = array<i64: 1, 8>}, {pipeline_mode = #tpu.pipeline_mode<synchronous>, transform_indices = @transform_12, window_bounds = array<i64: 1, 8>}, {pipeline_mode = #tpu.pipeline_mode<synchronous>, transform_indices = @transform_13, window_bounds = array<i64: 1, 1>}, {transform_indices = @transform_14, window_bounds = array<i64: 2, 8>}]} {
    %c0 = arith.constant 0 : index
    %c0_0 = arith.constant 0 : index
    %c0_1 = arith.constant 0 : index
    %0 = vector.load %arg1[%c0, %c0_0, %c0_1] : memref<2x8x32xf32, #tpu.memory_space<vmem>>, vector<2x8x32xf32>
    %1 = vector.shape_cast %0 : vector<2x8x32xf32> to vector<16x32xf32>
    %cst = arith.constant dense<0.000000e+00> : vector<16xf32>
    %2 = vector.multi_reduction <add>, %1, %cst [1] : vector<16x32xf32> to vector<16xf32>
    %3 = vector.shape_cast %2 : vector<16xf32> to vector<16x1xf32>
    %cst_2 = arith.constant 3.125000e-02 : f32
    %4 = vector.broadcast %cst_2 : f32 to vector<16x1xf32>
    %5 = arith.mulf %3, %4 : vector<16x1xf32>
    %6 = vector.broadcast %5 : vector<16x1xf32> to vector<16x32xf32>
    %7 = arith.subf %1, %6 : vector<16x32xf32>
    %8 = arith.mulf %7, %7 : vector<16x32xf32>
    %cst_3 = arith.constant dense<0.000000e+00> : vector<16xf32>
    %9 = vector.multi_reduction <add>, %8, %cst_3 [1] : vector<16x32xf32> to vector<16xf32>
    %10 = vector.shape_cast %9 : vector<16xf32> to vector<16x1xf32>
    %cst_4 = arith.constant 3.125000e-02 : f32
    %11 = vector.broadcast %cst_4 : f32 to vector<16x1xf32>
    %12 = arith.mulf %10, %11 : vector<16x1xf32>
    %cst_5 = arith.constant 9.99999974E-6 : f32
    %13 = vector.broadcast %cst_5 : f32 to vector<16x1xf32>
    %14 = arith.addf %12, %13 : vector<16x1xf32>
    %15 = math.rsqrt %14 : vector<16x1xf32>
    %16 = vector.broadcast %15 : vector<16x1xf32> to vector<16x32xf32>
    %17 = arith.mulf %7, %16 : vector<16x32xf32>
    %c0_6 = arith.constant 0 : index
    %c0_7 = arith.constant 0 : index
    %18 = vector.load %arg2[%c0_6, %c0_7] : memref<1x32xf32, #tpu.memory_space<vmem>>, vector<1x32xf32>
    %19 = vector.broadcast %18 : vector<1x32xf32> to vector<16x32xf32>
    %20 = arith.mulf %17, %19 : vector<16x32xf32>
    %c0_8 = arith.constant 0 : index
    %c0_9 = arith.constant 0 : index
    %21 = vector.load %arg3[%c0_8, %c0_9] : memref<1x32xf32, #tpu.memory_space<vmem>>, vector<1x32xf32>
    %22 = vector.broadcast %21 : vector<1x32xf32> to vector<16x32xf32>
    %23 = arith.addf %20, %22 : vector<16x32xf32>
    %24 = arith.truncf %23 : vector<16x32xf32> to vector<16x32xbf16>
    %c0_10 = arith.constant 0 : index
    %c0_11 = arith.constant 0 : index
    %25 = vector.load %arg4[%c0_10, %c0_11] : memref<32x16xbf16, #tpu.memory_space<vmem>>, vector<32x16xbf16>
    %cst_12 = arith.constant dense<0.000000e+00> : vector<16x16xf32>
    %26 = tpu.matmul %24, %25, %cst_12 {dimension_numbers = #tpu.dot_dimension_numbers<[1], [0], [0], [1], [0, 0, 1, 1], [], []>} : vector<16x32xbf16>, vector<32x16xbf16>, vector<16x16xf32> -> vector<16x16xf32>
    %c0_13 = arith.constant 0 : index
    %c0_14 = arith.constant 0 : index
    %27 = vector.load %arg6[%c0_13, %c0_14] : memref<32x16xbf16, #tpu.memory_space<vmem>>, vector<32x16xbf16>
    %cst_15 = arith.constant dense<0.000000e+00> : vector<16x16xf32>
    %28 = tpu.matmul %24, %27, %cst_15 {dimension_numbers = #tpu.dot_dimension_numbers<[1], [0], [0], [1], [0, 0, 1, 1], [], []>} : vector<16x32xbf16>, vector<32x16xbf16>, vector<16x16xf32> -> vector<16x16xf32>
    %c0_16 = arith.constant 0 : index
    %c0_17 = arith.constant 0 : index
    %29 = vector.load %arg5[%c0_16, %c0_17] : memref<1x16xf32, #tpu.memory_space<vmem>>, vector<1x16xf32>
    %30 = vector.broadcast %29 : vector<1x16xf32> to vector<16x16xf32>
    %31 = arith.addf %26, %30 : vector<16x16xf32>
    %cst_18 = arith.constant 5.000000e-01 : f32
    %32 = vector.broadcast %cst_18 : f32 to vector<16x16xf32>
    %33 = arith.mulf %32, %31 : vector<16x16xf32>
    %cst_19 = arith.constant 4.471500e-02 : f32
    %34 = vector.broadcast %cst_19 : f32 to vector<16x16xf32>
    %35 = arith.mulf %34, %31 : vector<16x16xf32>
    %36 = arith.mulf %35, %31 : vector<16x16xf32>
    %37 = arith.mulf %36, %31 : vector<16x16xf32>
    %38 = arith.addf %31, %37 : vector<16x16xf32>
    %cst_20 = arith.constant 0.797884583 : f32
    %39 = vector.broadcast %cst_20 : f32 to vector<16x16xf32>
    %40 = arith.mulf %39, %38 : vector<16x16xf32>
    %41 = math.tanh %40 : vector<16x16xf32>
    %cst_21 = arith.constant 1.000000e+00 : f32
    %42 = vector.broadcast %cst_21 : f32 to vector<16x16xf32>
    %43 = arith.addf %42, %41 : vector<16x16xf32>
    %44 = arith.mulf %33, %43 : vector<16x16xf32>
    %c0_22 = arith.constant 0 : index
    %c0_23 = arith.constant 0 : index
    %45 = vector.load %arg7[%c0_22, %c0_23] : memref<1x16xf32, #tpu.memory_space<vmem>>, vector<1x16xf32>
    %46 = vector.broadcast %45 : vector<1x16xf32> to vector<16x16xf32>
    %47 = arith.addf %28, %46 : vector<16x16xf32>
    %cst_24 = arith.constant 5.000000e-01 : f32
    %48 = vector.broadcast %cst_24 : f32 to vector<16x16xf32>
    %49 = arith.mulf %48, %47 : vector<16x16xf32>
    %cst_25 = arith.constant 4.471500e-02 : f32
    %50 = vector.broadcast %cst_25 : f32 to vector<16x16xf32>
    %51 = arith.mulf %50, %47 : vector<16x16xf32>
    %52 = arith.mulf %51, %47 : vector<16x16xf32>
    %53 = arith.mulf %52, %47 : vector<16x16xf32>
    %54 = arith.addf %47, %53 : vector<16x16xf32>
    %cst_26 = arith.constant 0.797884583 : f32
    %55 = vector.broadcast %cst_26 : f32 to vector<16x16xf32>
    %56 = arith.mulf %55, %54 : vector<16x16xf32>
    %57 = math.tanh %56 : vector<16x16xf32>
    %cst_27 = arith.constant 1.000000e+00 : f32
    %58 = vector.broadcast %cst_27 : f32 to vector<16x16xf32>
    %59 = arith.addf %58, %57 : vector<16x16xf32>
    %60 = arith.mulf %49, %59 : vector<16x16xf32>
    %61 = vector.shape_cast %60 : vector<16x16xf32> to vector<2x8x16xf32>
    %cst_28 = arith.constant dense<0.000000e+00> : vector<2x16xf32>
    %62 = vector.multi_reduction <add>, %61, %cst_28 [1] : vector<2x8x16xf32> to vector<2x16xf32>
    %cst_29 = arith.constant 1.250000e-01 : f32
    %63 = vector.broadcast %cst_29 : f32 to vector<2x16xf32>
    %64 = arith.mulf %62, %63 : vector<2x16xf32>
    %65 = arith.truncf %44 : vector<16x16xf32> to vector<16x16xbf16>
    %c0_30 = arith.constant 0 : index
    %c0_31 = arith.constant 0 : index
    %66 = vector.load %arg8[%c0_30, %c0_31] : memref<16x16xbf16, #tpu.memory_space<vmem>>, vector<16x16xbf16>
    %cst_32 = arith.constant dense<0.000000e+00> : vector<16x16xf32>
    %67 = tpu.matmul %65, %66, %cst_32 {dimension_numbers = #tpu.dot_dimension_numbers<[1], [0], [0], [1], [0, 0, 1, 1], [], []>} : vector<16x16xbf16>, vector<16x16xbf16>, vector<16x16xf32> -> vector<16x16xf32>
    %68 = arith.truncf %64 : vector<2x16xf32> to vector<2x16xbf16>
    %c0_33 = arith.constant 0 : index
    %c0_34 = arith.constant 0 : index
    %69 = vector.load %arg9[%c0_33, %c0_34] : memref<16x16xbf16, #tpu.memory_space<vmem>>, vector<16x16xbf16>
    %cst_35 = arith.constant dense<0.000000e+00> : vector<2x16xf32>
    %70 = tpu.matmul %68, %69, %cst_35 {dimension_numbers = #tpu.dot_dimension_numbers<[1], [0], [0], [1], [0, 0, 1, 1], [], []>} : vector<2x16xbf16>, vector<16x16xbf16>, vector<2x16xf32> -> vector<2x16xf32>
    %c0_36 = arith.constant 0 : index
    %c0_37 = arith.constant 0 : index
    %71 = vector.load %arg10[%c0_36, %c0_37] : memref<1x16xf32, #tpu.memory_space<vmem>>, vector<1x16xf32>
    %72 = vector.broadcast %71 : vector<1x16xf32> to vector<2x16xf32>
    %73 = arith.addf %70, %72 : vector<2x16xf32>
    %74 = vector.shape_cast %67 : vector<16x16xf32> to vector<2x8x16xf32>
    %75 = vector.shape_cast %73 : vector<2x16xf32> to vector<2x1x16xf32>
    %76 = vector.broadcast %75 : vector<2x1x16xf32> to vector<2x8x16xf32>
    %77 = arith.addf %74, %76 : vector<2x8x16xf32>
    %cst_38 = arith.constant 5.000000e-01 : f32
    %78 = vector.broadcast %cst_38 : f32 to vector<2x8x16xf32>
    %79 = arith.mulf %78, %77 : vector<2x8x16xf32>
    %cst_39 = arith.constant 4.471500e-02 : f32
    %80 = vector.broadcast %cst_39 : f32 to vector<2x8x16xf32>
    %81 = arith.mulf %80, %77 : vector<2x8x16xf32>
    %82 = arith.mulf %81, %77 : vector<2x8x16xf32>
    %83 = arith.mulf %82, %77 : vector<2x8x16xf32>
    %84 = arith.addf %77, %83 : vector<2x8x16xf32>
    %cst_40 = arith.constant 0.797884583 : f32
    %85 = vector.broadcast %cst_40 : f32 to vector<2x8x16xf32>
    %86 = arith.mulf %85, %84 : vector<2x8x16xf32>
    %87 = math.tanh %86 : vector<2x8x16xf32>
    %cst_41 = arith.constant 1.000000e+00 : f32
    %88 = vector.broadcast %cst_41 : f32 to vector<2x8x16xf32>
    %89 = arith.addf %88, %87 : vector<2x8x16xf32>
    %90 = arith.mulf %79, %89 : vector<2x8x16xf32>
    %91 = vector.shape_cast %90 : vector<2x8x16xf32> to vector<16x16xf32>
    %92 = arith.truncf %91 : vector<16x16xf32> to vector<16x16xbf16>
    %c0_42 = arith.constant 0 : index
    %c0_43 = arith.constant 0 : index
    %93 = vector.load %arg11[%c0_42, %c0_43] : memref<16x8xbf16, #tpu.memory_space<vmem>>, vector<16x8xbf16>
    %cst_44 = arith.constant dense<0.000000e+00> : vector<16x8xf32>
    %94 = tpu.matmul %92, %93, %cst_44 {dimension_numbers = #tpu.dot_dimension_numbers<[1], [0], [0], [1], [0, 0, 1, 1], [], []>} : vector<16x16xbf16>, vector<16x8xbf16>, vector<16x8xf32> -> vector<16x8xf32>
    %c0_45 = arith.constant 0 : index
    %c0_46 = arith.constant 0 : index
    %95 = vector.load %arg12[%c0_45, %c0_46] : memref<1x8xf32, #tpu.memory_space<vmem>>, vector<1x8xf32>
    %96 = vector.broadcast %95 : vector<1x8xf32> to vector<16x8xf32>
    %97 = arith.addf %94, %96 : vector<16x8xf32>
    %cst_47 = arith.constant 5.000000e-01 : f32
    %98 = vector.broadcast %cst_47 : f32 to vector<16x8xf32>
    %99 = arith.mulf %98, %97 : vector<16x8xf32>
    %cst_48 = arith.constant 4.471500e-02 : f32
    %100 = vector.broadcast %cst_48 : f32 to vector<16x8xf32>
    %101 = arith.mulf %100, %97 : vector<16x8xf32>
    %102 = arith.mulf %101, %97 : vector<16x8xf32>
    %103 = arith.mulf %102, %97 : vector<16x8xf32>
    %104 = arith.addf %97, %103 : vector<16x8xf32>
    %cst_49 = arith.constant 0.797884583 : f32
    %105 = vector.broadcast %cst_49 : f32 to vector<16x8xf32>
    %106 = arith.mulf %105, %104 : vector<16x8xf32>
    %107 = math.tanh %106 : vector<16x8xf32>
    %cst_50 = arith.constant 1.000000e+00 : f32
    %108 = vector.broadcast %cst_50 : f32 to vector<16x8xf32>
    %109 = arith.addf %108, %107 : vector<16x8xf32>
    %110 = arith.mulf %99, %109 : vector<16x8xf32>
    %111 = vector.shape_cast %110 : vector<16x8xf32> to vector<2x8x8xf32>
    %c0_51 = arith.constant 0 : index
    %c0_52 = arith.constant 0 : index
    %112 = vector.load %arg13[%c0_51, %c0_52] : memref<1x8xf32, #tpu.memory_space<vmem>>, vector<1x8xf32>
    %113 = vector.shape_cast %112 : vector<1x8xf32> to vector<1x1x8xf32>
    %114 = vector.broadcast %113 : vector<1x1x8xf32> to vector<2x8x8xf32>
    %115 = arith.mulf %111, %114 : vector<2x8x8xf32>
    %cst_53 = arith.constant dense<0.000000e+00> : vector<2x8xf32>
    %116 = vector.multi_reduction <add>, %115, %cst_53 [2] : vector<2x8x8xf32> to vector<2x8xf32>
    %c0_54 = arith.constant 0 : index
    %c0_55 = arith.constant 0 : index
    %117 = vector.load %arg14[%c0_54, %c0_55] : memref<1x1xf32, #tpu.memory_space<vmem>>, vector<1x1xf32>
    %118 = vector.broadcast %117 : vector<1x1xf32> to vector<2x8xf32>
    %119 = arith.addf %116, %118 : vector<2x8xf32>
    %c0_56 = arith.constant 0 : index
    %c0_57 = arith.constant 0 : index
    %120 = vector.load %arg15[%c0_56, %c0_57] : memref<2x8xf32, #tpu.memory_space<vmem>>, vector<2x8xf32>
    tpu.vector_store %arg15[%c0_56, %c0_57], %119 {strides = array<i32>} : memref<2x8xf32, #tpu.memory_space<vmem>>, vector<2x8xf32>,
    return
  }
  func.func @transform_0(%arg0: i32) -> (i32, i32, i32) {
    %c0_i32 = arith.constant 0 : i32
    %c0_i32_0 = arith.constant 0 : i32
    %c0_i32_1 = arith.constant 0 : i32
    return %arg0, %c0_i32, %c0_i32_0 : i32, i32, i32
  }
  func.func @transform_1(%arg0: i32) -> (i32, i32) {
    %c0_i32 = arith.constant 0 : i32
    %c0_i32_0 = arith.constant 0 : i32
    %c0_i32_1 = arith.constant 0 : i32
    return %c0_i32, %c0_i32_0 : i32, i32
  }
  func.func @transform_2(%arg0: i32) -> (i32, i32) {
    %c0_i32 = arith.constant 0 : i32
    %c0_i32_0 = arith.constant 0 : i32
    %c0_i32_1 = arith.constant 0 : i32
    return %c0_i32, %c0_i32_0 : i32, i32
  }
  func.func @transform_3(%arg0: i32) -> (i32, i32) {
    %c0_i32 = arith.constant 0 : i32
    %c0_i32_0 = arith.constant 0 : i32
    %c0_i32_1 = arith.constant 0 : i32
    return %c0_i32, %c0_i32_0 : i32, i32
  }
  func.func @transform_4(%arg0: i32) -> (i32, i32) {
    %c0_i32 = arith.constant 0 : i32
    %c0_i32_0 = arith.constant 0 : i32
    %c0_i32_1 = arith.constant 0 : i32
    return %c0_i32, %c0_i32_0 : i32, i32
  }
  func.func @transform_5(%arg0: i32) -> (i32, i32) {
    %c0_i32 = arith.constant 0 : i32
    %c0_i32_0 = arith.constant 0 : i32
    %c0_i32_1 = arith.constant 0 : i32
    return %c0_i32, %c0_i32_0 : i32, i32
  }
  func.func @transform_6(%arg0: i32) -> (i32, i32) {
    %c0_i32 = arith.constant 0 : i32
    %c0_i32_0 = arith.constant 0 : i32
    %c0_i32_1 = arith.constant 0 : i32
    return %c0_i32, %c0_i32_0 : i32, i32
  }
  func.func @transform_7(%arg0: i32) -> (i32, i32) {
    %c0_i32 = arith.constant 0 : i32
    %c0_i32_0 = arith.constant 0 : i32
    %c0_i32_1 = arith.constant 0 : i32
    return %c0_i32, %c0_i32_0 : i32, i32
  }
  func.func @transform_8(%arg0: i32) -> (i32, i32) {
    %c0_i32 = arith.constant 0 : i32
    %c0_i32_0 = arith.constant 0 : i32
    %c0_i32_1 = arith.constant 0 : i32
    return %c0_i32, %c0_i32_0 : i32, i32
  }
  func.func @transform_9(%arg0: i32) -> (i32, i32) {
    %c0_i32 = arith.constant 0 : i32
    %c0_i32_0 = arith.constant 0 : i32
    %c0_i32_1 = arith.constant 0 : i32
    return %c0_i32, %c0_i32_0 : i32, i32
  }
  func.func @transform_10(%arg0: i32) -> (i32, i32) {
    %c0_i32 = arith.constant 0 : i32
    %c0_i32_0 = arith.constant 0 : i32
    %c0_i32_1 = arith.constant 0 : i32
    return %c0_i32, %c0_i32_0 : i32, i32
  }
  func.func @transform_11(%arg0: i32) -> (i32, i32) {
    %c0_i32 = arith.constant 0 : i32
    %c0_i32_0 = arith.constant 0 : i32
    %c0_i32_1 = arith.constant 0 : i32
    return %c0_i32, %c0_i32_0 : i32, i32
  }
  func.func @transform_12(%arg0: i32) -> (i32, i32) {
    %c0_i32 = arith.constant 0 : i32
    %c0_i32_0 = arith.constant 0 : i32
    %c0_i32_1 = arith.constant 0 : i32
    return %c0_i32, %c0_i32_0 : i32, i32
  }
  func.func @transform_13(%arg0: i32) -> (i32, i32) {
    %c0_i32 = arith.constant 0 : i32
    %c0_i32_0 = arith.constant 0 : i32
    %c0_i32_1 = arith.constant 0 : i32
    return %c0_i32, %c0_i32_0 : i32, i32
  }
  func.func @transform_14(%arg0: i32) -> (i32, i32) {
    %c0_i32 = arith.constant 0 : i32
    %c0_i32_0 = arith.constant 0 : i32
    return %arg0, %c0_i32 : i32, i32
  }
}

</mosaic_0001>

<llo_original>
// kernel: tpu_custom_call.1
$region0: #{tpu_custom_call.1}
  #allocation0 [shape = 'u32[]', space=smem, size = 0x4, offset = 0x4, fixed_abs, tag = 'smem constant byte address 0x4 - core index']
  #allocation1 [shape = 'u32[72,128]{1,0:T(1,128)}', space=vmem, size = 0x9000, scoped, tag = 'internal scratch']
  #allocation2 [shape = 'f32[1,1]{1,0:T(1,128)S(1)}', space=vmem, size = 0x200, scoped, tag = 'scoped memory for tpu_custom_call.1']
  %s0 = inlined_call_operand.vmem [shape: f32[2,8,32], index: 0, kind: input, shape index: {}]
  %s1 = inlined_call_operand.vmem [shape: f32[1,32], index: 1, kind: input, shape index: {}]
  %s2 = inlined_call_operand.vmem [shape: f32[1,32], index: 2, kind: input, shape index: {}]
  %s3 = inlined_call_operand.vmem [shape: bf16[32,16], index: 3, kind: input, shape index: {}]
  %s4 = inlined_call_operand.vmem [shape: f32[1,16], index: 4, kind: input, shape index: {}]
  %s5 = inlined_call_operand.vmem [shape: bf16[32,16], index: 5, kind: input, shape index: {}]
  %s6 = inlined_call_operand.vmem [shape: f32[1,16], index: 6, kind: input, shape index: {}]
  %s7 = inlined_call_operand.vmem [shape: bf16[16,16], index: 7, kind: input, shape index: {}]
  %s8 = inlined_call_operand.vmem [shape: bf16[16,16], index: 8, kind: input, shape index: {}]
  %s9 = inlined_call_operand.vmem [shape: f32[1,16], index: 9, kind: input, shape index: {}]
  %s10 = inlined_call_operand.vmem [shape: bf16[16,8], index: 10, kind: input, shape index: {}]
  %s11 = inlined_call_operand.vmem [shape: f32[1,8], index: 11, kind: input, shape index: {}]
  %s12 = inlined_call_operand.vmem [shape: f32[1,8], index: 12, kind: input, shape index: {}]
  %s13 = inlined_call_operand.<no memory space> [shape: f32[1,1], index: 13, kind: input, shape index: {}]
  %s14 = inlined_call_operand.hbm [shape: f32[2,8], index: 14, kind: output, shape index: {}]
  %s15 = sld [smem:[#allocation0]]
  $region66: #{tpu_custom_call.1} parent=0
    _
  %s17 = ssub.s32 1, %s15
  %s18 = scalar_select 0, %s17, %s15
  %v19 = vstv %s13
  %20 = vst [vmem:[#allocation2] sm:$0x1] %v19
  $region1: #{tpu_custom_call.1} parent=0
    #allocation3 [shape = 'u8[1024]{0}', space=vmem, size = 0x400, scoped, tag = 'output window, operand 0, single buffered']
    #allocation4 [shape = 's32[1]{0}', space=sflag, size = 0x4, scoped, tag = 'scoped memory for tpu_custom_call.1']
    %21 = vsyncpa [#allocation4], 0
    // Predicated region
    $region2: #{tpu_custom_call.1} parent=1 // pred_check
      _
    $region3: #{tpu_custom_call.1} parent=1 // pred_check_branch
      %23 = sbr.rel (0) target = $region5
    $region4: #{tpu_custom_call.1} parent=1 // pred_region
      _
    $region5: #{tpu_custom_call.1} parent=1 // pred_fallthru
      _
    // Predicated region
    $region6: #{tpu_custom_call.1} parent=1 // pred_check
      _
    $region7: #{tpu_custom_call.1} parent=1 // pred_check_branch
      %25 = sbr.rel (0) target = $region9
    $region8: #{tpu_custom_call.1} parent=1 // pred_region
      _
    $region9: #{tpu_custom_call.1} parent=1 // pred_fallthru
      _
    // Predicated region
    $region10: #{tpu_custom_call.1} parent=1 // pred_check
      _
    $region11: #{tpu_custom_call.1} parent=1 // pred_check_branch
      %27 = sbr.rel (0) target = $region13
    $region12: #{tpu_custom_call.1} parent=1 // pred_region
      _
    $region13: #{tpu_custom_call.1} parent=1 // pred_fallthru
      _
    // Predicated region
    $region14: #{tpu_custom_call.1} parent=1 // pred_check
      _
    $region15: #{tpu_custom_call.1} parent=1 // pred_check_branch
      %29 = sbr.rel (0) target = $region17
    $region16: #{tpu_custom_call.1} parent=1 // pred_region
      _
    $region17: #{tpu_custom_call.1} parent=1 // pred_fallthru
      _
    // Predicated region
    $region18: #{tpu_custom_call.1} parent=1 // pred_check
      _
    $region19: #{tpu_custom_call.1} parent=1 // pred_check_branch
      %31 = sbr.rel (0) target = $region21
    $region20: #{tpu_custom_call.1} parent=1 // pred_region
      _
    $region21: #{tpu_custom_call.1} parent=1 // pred_fallthru
      _
    // Predicated region
    $region22: #{tpu_custom_call.1} parent=1 // pred_check
      _
    $region23: #{tpu_custom_call.1} parent=1 // pred_check_branch
      %33 = sbr.rel (0) target = $region25
    $region24: #{tpu_custom_call.1} parent=1 // pred_region
      _
    $region25: #{tpu_custom_call.1} parent=1 // pred_fallthru
      _
    // Predicated region
    $region26: #{tpu_custom_call.1} parent=1 // pred_check
      _
    $region27: #{tpu_custom_call.1} parent=1 // pred_check_branch
      %35 = sbr.rel (0) target = $region29
    $region28: #{tpu_custom_call.1} parent=1 // pred_region
      _
    $region29: #{tpu_custom_call.1} parent=1 // pred_fallthru
      _
    // Predicated region
    $region30: #{tpu_custom_call.1} parent=1 // pred_check
      _
    $region31: #{tpu_custom_call.1} parent=1 // pred_check_branch
      %37 = sbr.rel (0) target = $region33
    $region32: #{tpu_custom_call.1} parent=1 // pred_region
      _
    $region33: #{tpu_custom_call.1} parent=1 // pred_fallthru
      _
    // Predicated region
    $region34: #{tpu_custom_call.1} parent=1 // pred_check
      _
    $region35: #{tpu_custom_call.1} parent=1 // pred_check_branch
      %39 = sbr.rel (0) target = $region37
    $region36: #{tpu_custom_call.1} parent=1 // pred_region
      _
    $region37: #{tpu_custom_call.1} parent=1 // pred_fallthru
      _
    // Predicated region
    $region38: #{tpu_custom_call.1} parent=1 // pred_check
      _
    $region39: #{tpu_custom_call.1} parent=1 // pred_check_branch
      %41 = sbr.rel (0) target = $region41
    $region40: #{tpu_custom_call.1} parent=1 // pred_region
      _
    $region41: #{tpu_custom_call.1} parent=1 // pred_fallthru
      _
    // Predicated region
    $region42: #{tpu_custom_call.1} parent=1 // pred_check
      _
    $region43: #{tpu_custom_call.1} parent=1 // pred_check_branch
      %43 = sbr.rel (0) target = $region45
    $region44: #{tpu_custom_call.1} parent=1 // pred_region
      _
    $region45: #{tpu_custom_call.1} parent=1 // pred_fallthru
      _
    // Predicated region
    $region46: #{tpu_custom_call.1} parent=1 // pred_check
      _
    $region47: #{tpu_custom_call.1} parent=1 // pred_check_branch
      %45 = sbr.rel (0) target = $region49
    $region48: #{tpu_custom_call.1} parent=1 // pred_region
      _
    $region49: #{tpu_custom_call.1} parent=1 // pred_fallthru
      _
    // Predicated region
    $region50: #{tpu_custom_call.1} parent=1 // pred_check
      _
    $region51: #{tpu_custom_call.1} parent=1 // pred_check_branch
      %47 = sbr.rel (0) target = $region53
    $region52: #{tpu_custom_call.1} parent=1 // pred_region
      _
    $region53: #{tpu_custom_call.1} parent=1 // pred_fallthru
      _
    // Predicated region
    $region54: #{tpu_custom_call.1} parent=1 // pred_check
      _
    $region55: #{tpu_custom_call.1} parent=1 // pred_check_branch
      %49 = sbr.rel (0) target = $region57
    $region56: #{tpu_custom_call.1} parent=1 // pred_region
      _
    $region57: #{tpu_custom_call.1} parent=1 // pred_fallthru
      _
    %v51 = vld [vmem:[%s0] sm:$0xff]
    %v52 = vld [vmem:[%s0 + $0x8] sm:$0xff]
    %vm53 = vcmask 261120
    %v54 = vsel %vm53, %v51, 0.0
    %55 = vadd.xlane.f32.xlu0 %v54
    %v56 = vpop.xlane.xlu0 %55
    %v57 = vsel %vm53, %v52, 0.0
    %58 = vadd.xlane.f32.xlu0 %v57
    %v59 = vpop.xlane.xlu0 %58
    %v60 = vmul.f32 %v56, 0.03125
    %v61 = vmul.f32 %v59, 0.03125
    %v62 = vsub.f32 %v51, %v60
    %v63 = vsub.f32 %v52, %v61
    %v64 = vmul.f32 %v62, %v62
    %v65 = vmul.f32 %v63, %v63
    %v66 = vsel %vm53, %v64, 0.0
    %67 = vadd.xlane.f32.xlu0 %v66
    %v68 = vpop.xlane.xlu0 %67
    %v69 = vsel %vm53, %v65, 0.0
    %70 = vadd.xlane.f32.xlu0 %v69
    %v71 = vpop.xlane.xlu0 %70
    %v72 = vmul.f32 %v68, 0.03125
    %v73 = vmul.f32 %v71, 0.03125
    %v74 = vadd.f32 %v72, 1e-05
    %v75 = vadd.f32 %v73, 1e-05
    %v76 = vrsqrt.pop %v74
    %v77 = vmul.f32 %v76, %v74
    %v78 = vmul.f32 %v77, %v76
    %v79 = vmul.f32 0.5, %v78
    %v80 = vsub.f32 1.5, %v79
    %v81 = vmul.f32 %v76, %v80
    %vm82 = vweird.f32 %v74
    %vm83 = vweird.f32 %v76
    %vm84 = vmor %vm82, %vm83
    %v85 = vsel %vm84, %v76, %v81
    %v86 = vrsqrt.pop %v75
    %v87 = vmul.f32 %v86, %v75
    %v88 = vmul.f32 %v87, %v86
    %v89 = vmul.f32 0.5, %v88
    %v90 = vsub.f32 1.5, %v89
    %v91 = vmul.f32 %v86, %v90
    %vm92 = vweird.f32 %v75
    %vm93 = vweird.f32 %v86
    %vm94 = vmor %vm92, %vm93
    %v95 = vsel %vm94, %v86, %v91
    %v96 = vmul.f32 %v62, %v85
    %v97 = vmul.f32 %v63, %v95
    %v98 = vld [vmem:[%s1] sm:$0x1]
    %v100 = vperm.slane %v98, 0
    %v102 = vmul.f32 %v96, %v100
    %v103 = vmul.f32 %v97, %v100
    %v104 = vld [vmem:[%s2] sm:$0x1]
    %v106 = vperm.slane %v104, 0
    %v108 = vadd.f32 %v102, %v106
    %v109 = vadd.f32 %v103, %v106
    %v110 = vpack.c.bf16 %v109, %v108
    %v111 = vld [vmem:[%s3] sm:$0xf]
    %v112 = vld [vmem:[%s3 + $0x4] sm:$0xf]
    %v113 = vld [vmem:[%s3 + $0x8] sm:$0xf]
    %v114 = vld [vmem:[%s3 + $0xc] sm:$0xf]
    %v115 = vld [vmem:[%s5] sm:$0xf]
    %v116 = vld [vmem:[%s5 + $0x4] sm:$0xf]
    %v117 = vld [vmem:[%s5 + $0x8] sm:$0xf]
    %v118 = vld [vmem:[%s5 + $0xc] sm:$0xf]
    %v119 = vld [vmem:[%s4] sm:$0x1]
    %v121 = vperm.slane %v119, 0
    %v127 = vunpack.c.l.b16 %v111
    %v128 = vunpack.c.l.b16 %v112
    %v129 = vunpack.c.l.b16 %v113
    %v130 = vunpack.c.l.b16 %v114
    %v131 = vpack.c.b16 %v128, %v127
    %v132 = vpack.c.b16 %v130, %v129
    %v136 = vsel %vm53, %v110, 0
    %138 = vmatpush.bf16.msra.mxu0 0
    %139 = vmatpush.bf16.msra.mxu0 0
    %140 = vmatpush.bf16.msra.mxu0 0
    %141 = vmatpush.bf16.msra.mxu0 0
    %142 = vmatpush.bf16.msra.mxu0 0
    %143 = vmatpush.bf16.msra.mxu0 0
    %144 = vmatpush.bf16.msra.mxu0 %v132
    %145 = vmatpush.bf16.msra.mxu0 %v131
    %146 = vmatmul.bf16.gmra.mxu0 %v136
    %v147 = vpop.f32.mrf.mxu0
    %v148 = vadd.f32 %v121, %v147
    %v149 = vpop.f32.mrf.mxu0
    %v150 = vadd.f32 %v121, %v149
    %151 = vdwg.mxu0
    %v152 = vmul.f32 %v148, 0.5
    %v153 = vmul.f32 %v150, 0.5
    %v154 = vmul.f32 %v148, 0.044715
    %v155 = vmul.f32 %v150, 0.044715
    %v156 = vmul.f32 %v154, %v148
    %v157 = vmul.f32 %v155, %v150
    %v158 = vmul.f32 %v156, %v148
    %v159 = vmul.f32 %v157, %v150
    %v160 = vadd.f32 %v148, %v158
    %v161 = vadd.f32 %v150, %v159
    %v162 = vmul.f32 %v160, 0.7978846
    %v163 = vmul.f32 %v161, 0.7978846
    %v164 = vtanh.pop %v162
    %v165 = vtanh.pop %v163
    %v166 = vadd.f32 %v164, 1.0
    %v167 = vadd.f32 %v165, 1.0
    %v168 = vmul.f32 %v152, %v166
    %v169 = vmul.f32 %v153, %v167
    %v170 = vld [vmem:[%s6] sm:$0x1]
    %v172 = vperm.slane %v170, 0
    %v178 = vunpack.c.l.b16 %v115
    %v179 = vunpack.c.l.b16 %v116
    %v180 = vunpack.c.l.b16 %v117
    %v181 = vunpack.c.l.b16 %v118
    %v182 = vpack.c.b16 %v179, %v178
    %v183 = vpack.c.b16 %v181, %v180
    %186 = vmatpush.bf16.msra.mxu0 0
    %187 = vmatpush.bf16.msra.mxu0 0
    %188 = vmatpush.bf16.msra.mxu0 0
    %189 = vmatpush.bf16.msra.mxu0 0
    %190 = vmatpush.bf16.msra.mxu0 0
    %191 = vmatpush.bf16.msra.mxu0 0
    %192 = vmatpush.bf16.msra.mxu0 %v183
    %193 = vmatpush.bf16.msra.mxu0 %v182
    %194 = vmatmul.bf16.gmra.mxu0 %v136
    %v195 = vpop.f32.mrf.mxu0
    %v196 = vadd.f32 %v172, %v195
    %v197 = vpop.f32.mrf.mxu0
    %v198 = vadd.f32 %v172, %v197
    %199 = vdwg.mxu0
    %v200 = vmul.f32 %v196, 0.5
    %v201 = vmul.f32 %v198, 0.5
    %v202 = vmul.f32 %v196, 0.044715
    %v203 = vmul.f32 %v198, 0.044715
    %v204 = vmul.f32 %v202, %v196
    %v205 = vmul.f32 %v203, %v198
    %v206 = vmul.f32 %v204, %v196
    %v207 = vmul.f32 %v205, %v198
    %v208 = vadd.f32 %v196, %v206
    %v209 = vadd.f32 %v198, %v207
    %v210 = vmul.f32 %v208, 0.7978846
    %v211 = vmul.f32 %v209, 0.7978846
    %v212 = vtanh.pop %v210
    %v213 = vtanh.pop %v211
    %v214 = vadd.f32 %v212, 1.0
    %v215 = vadd.f32 %v213, 1.0
    %v216 = vmul.f32 %v200, %v214
    %v217 = vmul.f32 %v201, %v215
    %vm218 = vcmask 130048
    %v219 = vsel %vm218, %v216, 0.0
    %v220 = vrot.slane %v219, 4
    %v221 = vadd.f32 %v219, %v220
    %v222 = vrot.slane %v221, 2
    %v223 = vadd.f32 %v221, %v222
    %v224 = vrot.slane %v223, 1
    %v225 = vadd.f32 %v223, %v224
    %v226 = vsel %vm218, %v217, 0.0
    %v227 = vrot.slane %v226, 4
    %v228 = vadd.f32 %v226, %v227
    %v229 = vrot.slane %v228, 2
    %v230 = vadd.f32 %v228, %v229
    %v231 = vrot.slane %v230, 1
    %v232 = vadd.f32 %v230, %v231
    %v233 = vmul.f32 %v225, 0.125
    %v234 = vmul.f32 %v232, 0.125
    %v235 = vpack.c.bf16 %v169, %v168
    %v236 = vld [vmem:[%s7] sm:$0xf]
    %v237 = vld [vmem:[%s7 + $0x4] sm:$0xf]
    %v240 = vunpack.c.l.b16 %v236
    %v241 = vunpack.c.l.b16 %v237
    %v242 = vpack.c.b16 %v241, %v240
    %v245 = vsel %vm218, %v235, 0
    %247 = vmatpush.bf16.msra.mxu0 0
    %248 = vmatpush.bf16.msra.mxu0 0
    %249 = vmatpush.bf16.msra.mxu0 0
    %250 = vmatpush.bf16.msra.mxu0 0
    %251 = vmatpush.bf16.msra.mxu0 0
    %252 = vmatpush.bf16.msra.mxu0 0
    %253 = vmatpush.bf16.msra.mxu0 0
    %254 = vmatpush.bf16.msra.mxu0 %v242
    %255 = vmatmul.bf16.gmra.mxu0 %v245
    %v256 = vpop.f32.mrf.mxu0
    %v257 = vadd.f32 0.0, %v256
    %v258 = vpop.f32.mrf.mxu0
    %v259 = vadd.f32 0.0, %v258
    %260 = vdwg.mxu0
    %v261 = vpack.c.bf16 %v233, %v233
    %v262 = vpack.c.bf16 %v234, %v234
    %v263 = vld [vmem:[%s8] sm:$0xf]
    %v264 = vld [vmem:[%s8 + $0x4] sm:$0xf]
    %v265 = vld [vmem:[%s9] sm:$0x1]
    %v267 = vperm.slane %v265, 0
    %v271 = vunpack.c.l.b16 %v261
    %v272 = vunpack.c.l.b16 %v262
    %vm273 = vcmask 1041409
    %v274 = vsel %vm273, %v272, %v271
    %v275 = vpack.c.b16 %v274, %v274
    %v278 = vunpack.c.l.b16 %v263
    %v279 = vunpack.c.l.b16 %v264
    %v280 = vpack.c.b16 %v279, %v278
    %v283 = vsel %vm218, %v275, 0
    %285 = vmatpush.bf16.msra.mxu0 0
    %286 = vmatpush.bf16.msra.mxu0 0
    %287 = vmatpush.bf16.msra.mxu0 0
    %288 = vmatpush.bf16.msra.mxu0 0
    %289 = vmatpush.bf16.msra.mxu0 0
    %290 = vmatpush.bf16.msra.mxu0 0
    %291 = vmatpush.bf16.msra.mxu0 0
    %292 = vmatpush.bf16.msra.mxu0 %v280
    %293 = vmatmul.bf16.gmra.mxu0 %v283
    %v294 = vpop.f32.mrf.mxu0
    %v295 = vadd.f32 %v267, %v294
    %v296 = vpop.f32.mrf.mxu0
    %297 = vdwg.mxu0
    %v299 = vrot.slane %v295, 1
    %v300 = vperm.slane %v295, 0
    %v301 = vperm.slane %v299, 0
    %v304 = vadd.f32 %v257, %v300
    %v305 = vadd.f32 %v259, %v301
    %v306 = vmul.f32 %v304, 0.5
    %v307 = vmul.f32 %v305, 0.5
    %v308 = vmul.f32 %v304, 0.044715
    %v309 = vmul.f32 %v305, 0.044715
    %v310 = vmul.f32 %v308, %v304
    %v311 = vmul.f32 %v309, %v305
    %v312 = vmul.f32 %v310, %v304
    %v313 = vmul.f32 %v311, %v305
    %v314 = vadd.f32 %v304, %v312
    %v315 = vadd.f32 %v305, %v313
    %v316 = vmul.f32 %v314, 0.7978846
    %v317 = vmul.f32 %v315, 0.7978846
    %v318 = vtanh.pop %v316
    %v319 = vtanh.pop %v317
    %v320 = vadd.f32 %v318, 1.0
    %v321 = vadd.f32 %v319, 1.0
    %v322 = vmul.f32 %v306, %v320
    %v323 = vmul.f32 %v307, %v321
    %v324 = vpack.c.bf16 %v323, %v322
    %v325 = vld [vmem:[%s10] sm:$0xf]
    %v326 = vld [vmem:[%s10 + $0x4] sm:$0xf]
    %v327 = vld [vmem:[%s11] sm:$0x1]
    %v329 = vperm.slane %v327, 0
    %v333 = vunpack.c.l.b16 %v325
    %v334 = vunpack.c.l.b16 %v326
    %v335 = vpack.c.b16 %v334, %v333
    %v338 = vsel %vm218, %v324, 0
    %340 = vmatpush.bf16.msra.mxu0 0
    %341 = vmatpush.bf16.msra.mxu0 0
    %342 = vmatpush.bf16.msra.mxu0 0
    %343 = vmatpush.bf16.msra.mxu0 0
    %344 = vmatpush.bf16.msra.mxu0 0
    %345 = vmatpush.bf16.msra.mxu0 0
    %346 = vmatpush.bf16.msra.mxu0 0
    %347 = vmatpush.bf16.msra.mxu0 %v335
    %348 = vmatmul.bf16.gmra.mxu0 %v338
    %v349 = vpop.f32.mrf.mxu0
    %v350 = vadd.f32 %v329, %v349
    %v351 = vpop.f32.mrf.mxu0
    %v352 = vadd.f32 %v329, %v351
    %353 = vdwg.mxu0
    %v354 = vmul.f32 %v350, 0.5
    %v355 = vmul.f32 %v352, 0.5
    %v356 = vmul.f32 %v350, 0.044715
    %v357 = vmul.f32 %v352, 0.044715
    %v358 = vmul.f32 %v356, %v350
    %v359 = vmul.f32 %v357, %v352
    %v360 = vmul.f32 %v358, %v350
    %v361 = vmul.f32 %v359, %v352
    %v362 = vadd.f32 %v350, %v360
    %v363 = vadd.f32 %v352, %v361
    %v364 = vmul.f32 %v362, 0.7978846
    %v365 = vmul.f32 %v363, 0.7978846
    %v366 = vtanh.pop %v364
    %v367 = vtanh.pop %v365
    %v368 = vadd.f32 %v366, 1.0
    %v369 = vadd.f32 %v367, 1.0
    %v370 = vmul.f32 %v354, %v368
    %v371 = vmul.f32 %v355, %v369
    %v372 = vld [vmem:[%s12] sm:$0x1]
    %v374 = vperm.slane %v372, 0
    %v376 = vmul.f32 %v370, %v374
    %v377 = vmul.f32 %v371, %v374
    %vm378 = vcmask 64512
    %v379 = vsel %vm378, %v376, 0.0
    %380 = vadd.xlane.f32.xlu0 %v379
    %v381 = vpop.xlane.xlu0 %380
    %v382 = vsel %vm378, %v377, 0.0
    %383 = vadd.xlane.f32.xlu0 %v382
    %v384 = vpop.xlane.xlu0 %383
    %v385 = vld [vmem:[#allocation2] sm:$0x1]
    %v387 = vperm.slane %v385, 0
    %388 = vset.pattern.permute.xlu0 0
    %389 = vperm.xlu0 %388, %v387
    %v390 = vpop.permute.xlu0 %389
    %v392 = vadd.f32 %v381, %v390
    %v393 = vadd.f32 %v384, %v390
    %v396 = vlaneseq
    %v397 = vand.u32 %v396, 127
    %v398 = vperm.slane %v392, %v397
    %v399 = vperm.slane %v393, %v397
    %v400 = vsel %vm273, %v399, %v398
    %vm402 = vcmask 58368
    %403 = vst.msk [vmem:[#allocation3] sm:$0x3] %vm402, %v400
    // Predicated region
    $region58: #{tpu_custom_call.1} parent=1 // pred_check
      _
    $region59: #{tpu_custom_call.1} parent=1 // pred_check_branch
      %405 = sbr.rel (0) target = $region61
    $region60: #{tpu_custom_call.1} parent=1 // pred_region
      %407 = vsyncadd [#allocation4], 0
      %s409 = sshll.u32 [#allocation3], 4
      %s410 = int_to_ptr.vmem [resolvable:$true] %s409
      %s411 = sshll.u32 %s14, 4
      %s412 = int_to_ptr.hbm [resolvable:$true] %s411
      %414 = dma.vmem_to_hbm [thread:$0]  %s410, 32, %s412, [#allocation4]
    $region61: #{tpu_custom_call.1} parent=1 // pred_fallthru
      _
    // Predicated region
    $region62: #{tpu_custom_call.1} parent=1 // pred_check
      _
    $region63: #{tpu_custom_call.1} parent=1 // pred_check_branch
      %416 = sbr.rel (0) target = $region65
    $region64: #{tpu_custom_call.1} parent=1 // pred_region
      %418 = dma.done [#allocation4], 32
    $region65: #{tpu_custom_call.1} parent=1 // pred_fallthru
      _
    %419 = vsyncpa [#allocation4], 1

// kernel: tpu_custom_call.1
$region0: #{tpu_custom_call.1}
  #allocation0 [shape = 'u32[]', space=smem, size = 0x4, offset = 0x4, fixed_abs, tag = 'smem constant byte address 0x4 - core index']
  #allocation1 [shape = 'u32[72,128]{1,0:T(1,128)}', space=vmem, size = 0x9000, scoped, tag = 'internal scratch']
  #allocation2 [shape = 'f32[1,1]{1,0:T(1,128)S(1)}', space=vmem, size = 0x200, scoped, tag = 'scoped memory for tpu_custom_call.1']
  %s0 = inlined_call_operand.vmem [shape: f32[2,8,32], index: 0, kind: input, shape index: {}]
  %s1 = inlined_call_operand.vmem [shape: f32[1,32], index: 1, kind: input, shape index: {}]
  %s2 = inlined_call_operand.vmem [shape: f32[1,32], index: 2, kind: input, shape index: {}]
  %s3 = inlined_call_operand.vmem [shape: bf16[32,16], index: 3, kind: input, shape index: {}]
  %s4 = inlined_call_operand.vmem [shape: f32[1,16], index: 4, kind: input, shape index: {}]
  %s5 = inlined_call_operand.vmem [shape: bf16[32,16], index: 5, kind: input, shape index: {}]
  %s6 = inlined_call_operand.vmem [shape: f32[1,16], index: 6, kind: input, shape index: {}]
  %s7 = inlined_call_operand.vmem [shape: bf16[16,16], index: 7, kind: input, shape index: {}]
  %s8 = inlined_call_operand.vmem [shape: bf16[16,16], index: 8, kind: input, shape index: {}]
  %s9 = inlined_call_operand.vmem [shape: f32[1,16], index: 9, kind: input, shape index: {}]
  %s10 = inlined_call_operand.vmem [shape: bf16[16,8], index: 10, kind: input, shape index: {}]
  %s11 = inlined_call_operand.vmem [shape: f32[1,8], index: 11, kind: input, shape index: {}]
  %s12 = inlined_call_operand.vmem [shape: f32[1,8], index: 12, kind: input, shape index: {}]
  %s13 = inlined_call_operand.<no memory space> [shape: f32[1,1], index: 13, kind: input, shape index: {}]
  %s14 = inlined_call_operand.hbm [shape: f32[2,8], index: 14, kind: output, shape index: {}]
  %s15 = sld [smem:[#allocation0]]
  $region66: #{tpu_custom_call.1} parent=0
    _
  %s17 = ssub.s32 1, %s15
  %s18 = scalar_select 0, %s17, %s15
  %v19 = vstv %s13
  %20 = vst [vmem:[#allocation2] sm:$0x1] %v19
  $region1: #{tpu_custom_call.1} parent=0
    #allocation3 [shape = 'u8[1024]{0}', space=vmem, size = 0x400, scoped, tag = 'output window, operand 0, single buffered']
    #allocation4 [shape = 's32[1]{0}', space=sflag, size = 0x4, scoped, tag = 'scoped memory for tpu_custom_call.1']
    %21 = vsyncpa [#allocation4], 0
    // Predicated region
    $region2: #{tpu_custom_call.1} parent=1 // pred_check
      _
    $region3: #{tpu_custom_call.1} parent=1 // pred_check_branch
      %23 = sbr.rel (0) target = $region5
    $region4: #{tpu_custom_call.1} parent=1 // pred_region
      _
    $region5: #{tpu_custom_call.1} parent=1 // pred_fallthru
      _
    // Predicated region
    $region6: #{tpu_custom_call.1} parent=1 // pred_check
      _
    $region7: #{tpu_custom_call.1} parent=1 // pred_check_branch
      %25 = sbr.rel (0) target = $region9
    $region8: #{tpu_custom_call.1} parent=1 // pred_region
      _
    $region9: #{tpu_custom_call.1} parent=1 // pred_fallthru
      _
    // Predicated region
    $region10: #{tpu_custom_call.1} parent=1 // pred_check
      _
    $region11: #{tpu_custom_call.1} parent=1 // pred_check_branch
      %27 = sbr.rel (0) target = $region13
    $region12: #{tpu_custom_call.1} parent=1 // pred_region
      _
    $region13: #{tpu_custom_call.1} parent=1 // pred_fallthru
      _
    // Predicated region
    $region14: #{tpu_custom_call.1} parent=1 // pred_check
      _
    $region15: #{tpu_custom_call.1} parent=1 // pred_check_branch
      %29 = sbr.rel (0) target = $region17
    $region16: #{tpu_custom_call.1} parent=1 // pred_region
      _
    $region17: #{tpu_custom_call.1} parent=1 // pred_fallthru
      _
    // Predicated region
    $region18: #{tpu_custom_call.1} parent=1 // pred_check
      _
    $region19: #{tpu_custom_call.1} parent=1 // pred_check_branch
      %31 = sbr.rel (0) target = $region21
    $region20: #{tpu_custom_call.1} parent=1 // pred_region
      _
    $region21: #{tpu_custom_call.1} parent=1 // pred_fallthru
      _
    // Predicated region
    $region22: #{tpu_custom_call.1} parent=1 // pred_check
      _
    $region23: #{tpu_custom_call.1} parent=1 // pred_check_branch
      %33 = sbr.rel (0) target = $region25
    $region24: #{tpu_custom_call.1} parent=1 // pred_region
      _
    $region25: #{tpu_custom_call.1} parent=1 // pred_fallthru
      _
    // Predicated region
    $region26: #{tpu_custom_call.1} parent=1 // pred_check
      _
    $region27: #{tpu_custom_call.1} parent=1 // pred_check_branch
      %35 = sbr.rel (0) target = $region29
    $region28: #{tpu_custom_call.1} parent=1 // pred_region
      _
    $region29: #{tpu_custom_call.1} parent=1 // pred_fallthru
      _
    // Predicated region
    $region30: #{tpu_custom_call.1} parent=1 // pred_check
      _
    $region31: #{tpu_custom_call.1} parent=1 // pred_check_branch
      %37 = sbr.rel (0) target = $region33
    $region32: #{tpu_custom_call.1} parent=1 // pred_region
      _
    $region33: #{tpu_custom_call.1} parent=1 // pred_fallthru
      _
    // Predicated region
    $region34: #{tpu_custom_call.1} parent=1 // pred_check
      _
    $region35: #{tpu_custom_call.1} parent=1 // pred_check_branch
      %39 = sbr.rel (0) target = $region37
    $region36: #{tpu_custom_call.1} parent=1 // pred_region
      _
    $region37: #{tpu_custom_call.1} parent=1 // pred_fallthru
      _
    // Predicated region
    $region38: #{tpu_custom_call.1} parent=1 // pred_check
      _
    $region39: #{tpu_custom_call.1} parent=1 // pred_check_branch
      %41 = sbr.rel (0) target = $region41
    $region40: #{tpu_custom_call.1} parent=1 // pred_region
      _
    $region41: #{tpu_custom_call.1} parent=1 // pred_fallthru
      _
    // Predicated region
    $region42: #{tpu_custom_call.1} parent=1 // pred_check
      _
    $region43: #{tpu_custom_call.1} parent=1 // pred_check_branch
      %43 = sbr.rel (0) target = $region45
    $region44: #{tpu_custom_call.1} parent=1 // pred_region
      _
    $region45: #{tpu_custom_call.1} parent=1 // pred_fallthru
      _
    // Predicated region
    $region46: #{tpu_custom_call.1} parent=1 // pred_check
      _
    $region47: #{tpu_custom_call.1} parent=1 // pred_check_branch
      %45 = sbr.rel (0) target = $region49
    $region48: #{tpu_custom_call.1} parent=1 // pred_region
      _
    $region49: #{tpu_custom_call.1} parent=1 // pred_fallthru
      _
    // Predicated region
    $region50: #{tpu_custom_call.1} parent=1 // pred_check
      _
    $region51: #{tpu_custom_call.1} parent=1 // pred_check_branch
      %47 = sbr.rel (0) target = $region53
    $region52: #{tpu_custom_call.1} parent=1 // pred_region
      _
    $region53: #{tpu_custom_call.1} parent=1 // pred_fallthru
      _
    // Predicated region
    $region54: #{tpu_custom_call.1} parent=1 // pred_check
      _
    $region55: #{tpu_custom_call.1} parent=1 // pred_check_branch
      %49 = sbr.rel (0) target = $region57
    $region56: #{tpu_custom_call.1} parent=1 // pred_region
      _
    $region57: #{tpu_custom_call.1} parent=1 // pred_fallthru
      _
    %v51 = vld [vmem:[%s0] sm:$0xff]
    %v52 = vld [vmem:[%s0 + $0x8] sm:$0xff]
    %vm53 = vcmask 261120
    %v54 = vsel %vm53, %v51, 0.0
    %55 = vadd.xlane.f32.xlu0 %v54
    %v56 = vpop.xlane.xlu0 %55
    %v57 = vsel %vm53, %v52, 0.0
    %58 = vadd.xlane.f32.xlu0 %v57
    %v59 = vpop.xlane.xlu0 %58
    %v60 = vmul.f32 %v56, 0.03125
    %v61 = vmul.f32 %v59, 0.03125
    %v62 = vsub.f32 %v51, %v60
    %v63 = vsub.f32 %v52, %v61
    %v64 = vmul.f32 %v62, %v62
    %v65 = vmul.f32 %v63, %v63
    %v66 = vsel %vm53, %v64, 0.0
    %67 = vadd.xlane.f32.xlu0 %v66
    %v68 = vpop.xlane.xlu0 %67
    %v69 = vsel %vm53, %v65, 0.0
    %70 = vadd.xlane.f32.xlu0 %v69
    %v71 = vpop.xlane.xlu0 %70
    %v72 = vmul.f32 %v68, 0.03125
    %v73 = vmul.f32 %v71, 0.03125
    %v74 = vadd.f32 %v72, 1e-05
    %v75 = vadd.f32 %v73, 1e-05
    %v76 = vrsqrt.pop %v74
    %v77 = vmul.f32 %v76, %v74
    %v78 = vmul.f32 %v77, %v76
    %v79 = vmul.f32 0.5, %v78
    %v80 = vsub.f32 1.5, %v79
    %v81 = vmul.f32 %v76, %v80
    %vm82 = vweird.f32 %v74
    %vm83 = vweird.f32 %v76
    %vm84 = vmor %vm82, %vm83
    %v85 = vsel %vm84, %v76, %v81
    %v86 = vrsqrt.pop %v75
    %v87 = vmul.f32 %v86, %v75
    %v88 = vmul.f32 %v87, %v86
    %v89 = vmul.f32 0.5, %v88
    %v90 = vsub.f32 1.5, %v89
    %v91 = vmul.f32 %v86, %v90
    %vm92 = vweird.f32 %v75
    %vm93 = vweird.f32 %v86
    %vm94 = vmor %vm92, %vm93
    %v95 = vsel %vm94, %v86, %v91
    %v96 = vmul.f32 %v62, %v85
    %v97 = vmul.f32 %v63, %v95
    %v98 = vld [vmem:[%s1] sm:$0x1]
    %v100 = vperm.slane %v98, 0
    %v102 = vmul.f32 %v96, %v100
    %v103 = vmul.f32 %v97, %v100
    %v104 = vld [vmem:[%s2] sm:$0x1]
    %v106 = vperm.slane %v104, 0
    %v108 = vadd.f32 %v102, %v106
    %v109 = vadd.f32 %v103, %v106
    %v110 = vpack.c.bf16 %v109, %v108
    %v111 = vld [vmem:[%s3] sm:$0xf]
    %v112 = vld [vmem:[%s3 + $0x4] sm:$0xf]
    %v113 = vld [vmem:[%s3 + $0x8] sm:$0xf]
    %v114 = vld [vmem:[%s3 + $0xc] sm:$0xf]
    %v115 = vld [vmem:[%s5] sm:$0xf]
    %v116 = vld [vmem:[%s5 + $0x4] sm:$0xf]
    %v117 = vld [vmem:[%s5 + $0x8] sm:$0xf]
    %v118 = vld [vmem:[%s5 + $0xc] sm:$0xf]
    %v119 = vld [vmem:[%s4] sm:$0x1]
    %v121 = vperm.slane %v119, 0
    %v127 = vunpack.c.l.b16 %v111
    %v128 = vunpack.c.l.b16 %v112
    %v129 = vunpack.c.l.b16 %v113
    %v130 = vunpack.c.l.b16 %v114
    %v131 = vpack.c.b16 %v128, %v127
    %v132 = vpack.c.b16 %v130, %v129
    %v136 = vsel %vm53, %v110, 0
    %138 = vmatpush.bf16.msra.mxu0 0
    %139 = vmatpush.bf16.msra.mxu0 0
    %140 = vmatpush.bf16.msra.mxu0 0
    %141 = vmatpush.bf16.msra.mxu0 0
    %142 = vmatpush.bf16.msra.mxu0 0
    %143 = vmatpush.bf16.msra.mxu0 0
    %144 = vmatpush.bf16.msra.mxu0 %v132
    %145 = vmatpush.bf16.msra.mxu0 %v131
    %146 = vmatmul.bf16.gmra.mxu0 %v136
    %v147 = vpop.f32.mrf.mxu0
    %v148 = vadd.f32 %v121, %v147
    %v149 = vpop.f32.mrf.mxu0
    %v150 = vadd.f32 %v121, %v149
    %151 = vdwg.mxu0
    %v152 = vmul.f32 %v148, 0.5
    %v153 = vmul.f32 %v150, 0.5
    %v154 = vmul.f32 %v148, 0.044715
    %v155 = vmul.f32 %v150, 0.044715
    %v156 = vmul.f32 %v154, %v148
    %v157 = vmul.f32 %v155, %v150
    %v158 = vmul.f32 %v156, %v148
    %v159 = vmul.f32 %v157, %v150
    %v160 = vadd.f32 %v148, %v158
    %v161 = vadd.f32 %v150, %v159
    %v162 = vmul.f32 %v160, 0.7978846
    %v163 = vmul.f32 %v161, 0.7978846
    %v164 = vtanh.pop %v162
    %v165 = vtanh.pop %v163
    %v166 = vadd.f32 %v164, 1.0
    %v167 = vadd.f32 %v165, 1.0
    %v168 = vmul.f32 %v152, %v166
    %v169 = vmul.f32 %v153, %v167
    %v170 = vld [vmem:[%s6] sm:$0x1]
    %v172 = vperm.slane %v170, 0
    %v178 = vunpack.c.l.b16 %v115
    %v179 = vunpack.c.l.b16 %v116
    %v180 = vunpack.c.l.b16 %v117
    %v181 = vunpack.c.l.b16 %v118
    %v182 = vpack.c.b16 %v179, %v178
    %v183 = vpack.c.b16 %v181, %v180
    %186 = vmatpush.bf16.msra.mxu0 0
    %187 = vmatpush.bf16.msra.mxu0 0
    %188 = vmatpush.bf16.msra.mxu0 0
    %189 = vmatpush.bf16.msra.mxu0 0
    %190 = vmatpush.bf16.msra.mxu0 0
    %191 = vmatpush.bf16.msra.mxu0 0
    %192 = vmatpush.bf16.msra.mxu0 %v183
    %193 = vmatpush.bf16.msra.mxu0 %v182
    %194 = vmatmul.bf16.gmra.mxu0 %v136
    %v195 = vpop.f32.mrf.mxu0
    %v196 = vadd.f32 %v172, %v195
    %v197 = vpop.f32.mrf.mxu0
    %v198 = vadd.f32 %v172, %v197
    %199 = vdwg.mxu0
    %v200 = vmul.f32 %v196, 0.5
    %v201 = vmul.f32 %v198, 0.5
    %v202 = vmul.f32 %v196, 0.044715
    %v203 = vmul.f32 %v198, 0.044715
    %v204 = vmul.f32 %v202, %v196
    %v205 = vmul.f32 %v203, %v198
    %v206 = vmul.f32 %v204, %v196
    %v207 = vmul.f32 %v205, %v198
    %v208 = vadd.f32 %v196, %v206
    %v209 = vadd.f32 %v198, %v207
    %v210 = vmul.f32 %v208, 0.7978846
    %v211 = vmul.f32 %v209, 0.7978846
    %v212 = vtanh.pop %v210
    %v213 = vtanh.pop %v211
    %v214 = vadd.f32 %v212, 1.0
    %v215 = vadd.f32 %v213, 1.0
    %v216 = vmul.f32 %v200, %v214
    %v217 = vmul.f32 %v201, %v215
    %vm218 = vcmask 130048
    %v219 = vsel %vm218, %v216, 0.0
    %v220 = vrot.slane %v219, 4
    %v221 = vadd.f32 %v219, %v220
    %v222 = vrot.slane %v221, 2
    %v223 = vadd.f32 %v221, %v222
    %v224 = vrot.slane %v223, 1
    %v225 = vadd.f32 %v223, %v224
    %v226 = vsel %vm218, %v217, 0.0
    %v227 = vrot.slane %v226, 4
    %v228 = vadd.f32 %v226, %v227
    %v229 = vrot.slane %v228, 2
    %v230 = vadd.f32 %v228, %v229
    %v231 = vrot.slane %v230, 1
    %v232 = vadd.f32 %v230, %v231
    %v233 = vmul.f32 %v225, 0.125
    %v234 = vmul.f32 %v232, 0.125
    %v235 = vpack.c.bf16 %v169, %v168
    %v236 = vld [vmem:[%s7] sm:$0xf]
    %v237 = vld [vmem:[%s7 + $0x4] sm:$0xf]
    %v240 = vunpack.c.l.b16 %v236
    %v241 = vunpack.c.l.b16 %v237
    %v242 = vpack.c.b16 %v241, %v240
    %v245 = vsel %vm218, %v235, 0
    %247 = vmatpush.bf16.msra.mxu0 0
    %248 = vmatpush.bf16.msra.mxu0 0
    %249 = vmatpush.bf16.msra.mxu0 0
    %250 = vmatpush.bf16.msra.mxu0 0
    %251 = vmatpush.bf16.msra.mxu0 0
    %252 = vmatpush.bf16.msra.mxu0 0
    %253 = vmatpush.bf16.msra.mxu0 0
    %254 = vmatpush.bf16.msra.mxu0 %v242
    %255 = vmatmul.bf16.gmra.mxu0 %v245
    %v256 = vpop.f32.mrf.mxu0
    %v257 = vadd.f32 0.0, %v256
    %v258 = vpop.f32.mrf.mxu0
    %v259 = vadd.f32 0.0, %v258
    %260 = vdwg.mxu0
    %v261 = vpack.c.bf16 %v233, %v233
    %v262 = vpack.c.bf16 %v234, %v234
    %v263 = vld [vmem:[%s8] sm:$0xf]
    %v264 = vld [vmem:[%s8 + $0x4] sm:$0xf]
    %v265 = vld [vmem:[%s9] sm:$0x1]
    %v267 = vperm.slane %v265, 0
    %v271 = vunpack.c.l.b16 %v261
    %v272 = vunpack.c.l.b16 %v262
    %vm273 = vcmask 1041409
    %v274 = vsel %vm273, %v272, %v271
    %v275 = vpack.c.b16 %v274, %v274
    %v278 = vunpack.c.l.b16 %v263
    %v279 = vunpack.c.l.b16 %v264
    %v280 = vpack.c.b16 %v279, %v278
    %v283 = vsel %vm218, %v275, 0
    %285 = vmatpush.bf16.msra.mxu0 0
    %286 = vmatpush.bf16.msra.mxu0 0
    %287 = vmatpush.bf16.msra.mxu0 0
    %288 = vmatpush.bf16.msra.mxu0 0
    %289 = vmatpush.bf16.msra.mxu0 0
    %290 = vmatpush.bf16.msra.mxu0 0
    %291 = vmatpush.bf16.msra.mxu0 0
    %292 = vmatpush.bf16.msra.mxu0 %v280
    %293 = vmatmul.bf16.gmra.mxu0 %v283
    %v294 = vpop.f32.mrf.mxu0
    %v295 = vadd.f32 %v267, %v294
    %v296 = vpop.f32.mrf.mxu0
    %297 = vdwg.mxu0
    %v299 = vrot.slane %v295, 1
    %v300 = vperm.slane %v295, 0
    %v301 = vperm.slane %v299, 0
    %v304 = vadd.f32 %v257, %v300
    %v305 = vadd.f32 %v259, %v301
    %v306 = vmul.f32 %v304, 0.5
    %v307 = vmul.f32 %v305, 0.5
    %v308 = vmul.f32 %v304, 0.044715
    %v309 = vmul.f32 %v305, 0.044715
    %v310 = vmul.f32 %v308, %v304
    %v311 = vmul.f32 %v309, %v305
    %v312 = vmul.f32 %v310, %v304
    %v313 = vmul.f32 %v311, %v305
    %v314 = vadd.f32 %v304, %v312
    %v315 = vadd.f32 %v305, %v313
    %v316 = vmul.f32 %v314, 0.7978846
    %v317 = vmul.f32 %v315, 0.7978846
    %v318 = vtanh.pop %v316
    %v319 = vtanh.pop %v317
    %v320 = vadd.f32 %v318, 1.0
    %v321 = vadd.f32 %v319, 1.0
    %v322 = vmul.f32 %v306, %v320
    %v323 = vmul.f32 %v307, %v321
    %v324 = vpack.c.bf16 %v323, %v322
    %v325 = vld [vmem:[%s10] sm:$0xf]
    %v326 = vld [vmem:[%s10 + $0x4] sm:$0xf]
    %v327 = vld [vmem:[%s11] sm:$0x1]
    %v329 = vperm.slane %v327, 0
    %v333 = vunpack.c.l.b16 %v325
    %v334 = vunpack.c.l.b16 %v326
    %v335 = vpack.c.b16 %v334, %v333
    %v338 = vsel %vm218, %v324, 0
    %340 = vmatpush.bf16.msra.mxu0 0
    %341 = vmatpush.bf16.msra.mxu0 0
    %342 = vmatpush.bf16.msra.mxu0 0
    %343 = vmatpush.bf16.msra.mxu0 0
    %344 = vmatpush.bf16.msra.mxu0 0
    %345 = vmatpush.bf16.msra.mxu0 0
    %346 = vmatpush.bf16.msra.mxu0 0
    %347 = vmatpush.bf16.msra.mxu0 %v335
    %348 = vmatmul.bf16.gmra.mxu0 %v338
    %v349 = vpop.f32.mrf.mxu0
    %v350 = vadd.f32 %v329, %v349
    %v351 = vpop.f32.mrf.mxu0
    %v352 = vadd.f32 %v329, %v351
    %353 = vdwg.mxu0
    %v354 = vmul.f32 %v350, 0.5
    %v355 = vmul.f32 %v352, 0.5
    %v356 = vmul.f32 %v350, 0.044715
    %v357 = vmul.f32 %v352, 0.044715
    %v358 = vmul.f32 %v356, %v350
    %v359 = vmul.f32 %v357, %v352
    %v360 = vmul.f32 %v358, %v350
    %v361 = vmul.f32 %v359, %v352
    %v362 = vadd.f32 %v350, %v360
    %v363 = vadd.f32 %v352, %v361
    %v364 = vmul.f32 %v362, 0.7978846
    %v365 = vmul.f32 %v363, 0.7978846
    %v366 = vtanh.pop %v364
    %v367 = vtanh.pop %v365
    %v368 = vadd.f32 %v366, 1.0
    %v369 = vadd.f32 %v367, 1.0
    %v370 = vmul.f32 %v354, %v368
    %v371 = vmul.f32 %v355, %v369
    %v372 = vld [vmem:[%s12] sm:$0x1]
    %v374 = vperm.slane %v372, 0
    %v376 = vmul.f32 %v370, %v374
    %v377 = vmul.f32 %v371, %v374
    %vm378 = vcmask 64512
    %v379 = vsel %vm378, %v376, 0.0
    %380 = vadd.xlane.f32.xlu0 %v379
    %v381 = vpop.xlane.xlu0 %380
    %v382 = vsel %vm378, %v377, 0.0
    %383 = vadd.xlane.f32.xlu0 %v382
    %v384 = vpop.xlane.xlu0 %383
    %v385 = vld [vmem:[#allocation2] sm:$0x1]
    %v387 = vperm.slane %v385, 0
    %388 = vset.pattern.permute.xlu0 0
    %389 = vperm.xlu0 %388, %v387
    %v390 = vpop.permute.xlu0 %389
    %v392 = vadd.f32 %v381, %v390
    %v393 = vadd.f32 %v384, %v390
    %v396 = vlaneseq
    %v397 = vand.u32 %v396, 127
    %v398 = vperm.slane %v392, %v397
    %v399 = vperm.slane %v393, %v397
    %v400 = vsel %vm273, %v399, %v398
    %vm402 = vcmask 58368
    %403 = vst.msk [vmem:[#allocation3] sm:$0x3] %vm402, %v400
    // Predicated region
    $region58: #{tpu_custom_call.1} parent=1 // pred_check
      _
    $region59: #{tpu_custom_call.1} parent=1 // pred_check_branch
      %405 = sbr.rel (0) target = $region61
    $region60: #{tpu_custom_call.1} parent=1 // pred_region
      %407 = vsyncadd [#allocation4], 0
      %s409 = sshll.u32 [#allocation3], 4
      %s410 = int_to_ptr.vmem [resolvable:$true] %s409
      %s411 = sshll.u32 %s14, 4
      %s412 = int_to_ptr.hbm [resolvable:$true] %s411
      %414 = dma.vmem_to_hbm [thread:$0]  %s410, 32, %s412, [#allocation4]
    $region61: #{tpu_custom_call.1} parent=1 // pred_fallthru
      _
    // Predicated region
    $region62: #{tpu_custom_call.1} parent=1 // pred_check
      _
    $region63: #{tpu_custom_call.1} parent=1 // pred_check_branch
      %416 = sbr.rel (0) target = $region65
    $region64: #{tpu_custom_call.1} parent=1 // pred_region
      %418 = dma.done [#allocation4], 32
    $region65: #{tpu_custom_call.1} parent=1 // pred_fallthru
      _
    %419 = vsyncpa [#allocation4], 1

</llo_original>
